<compile_context>
chip_gen: v7x
topology: tpu7x:2x2x1
jax: 0.10.0
libtpu: 0.0.40
codegen_flags: <defaults>
</compile_context>

<pallas_src>
import functools
import math

import jax
import jax.numpy as jnp
from jax.experimental import pallas as pl
from jax.experimental.pallas import tpu as pltpu


def _mha_ff2_kernel(x_ref, feats_ref,
                    wq_ref, bq_ref, wk_ref, bk_ref, wv_ref, bv_ref,
                    wo_ref, bo_ref, gamma_ref, beta_ref,
                    o_ref, *, n_heads, d_k, eps):
    tb, lq, D = x_ref.shape
    lk = feats_ref.shape[1]
    rq = tb * lq
    rk = tb * lk

    x = x_ref[...].reshape(rq, D)          # (rows_q, D) f32
    feats = feats_ref[...].reshape(rk, D)  # (rows_k, D) f32

    # --- SublayerConnection pre-norm (unbiased std, eps added to std), f32. ---
    mean = jnp.sum(x, axis=-1, keepdims=True) * (1.0 / D)
    xc = x - mean
    var = jnp.sum(xc * xc, axis=-1, keepdims=True) * (1.0 / (D - 1))
    inv_std = pl.reciprocal(jnp.sqrt(var) + eps)      # exact reciprocal (parity with divide)
    y = gamma_ref[...] * (xc * inv_std) + beta_ref[...]

    # --- bf16 MXU operands, f32 accumulation. Weights are pre-transposed and bf16;
    #     the 1/sqrt(d_k) softmax scale is already folded into Wq^T / bq. ---
    y_b = y.astype(jnp.bfloat16)
    f_b = feats.astype(jnp.bfloat16)

    q = jnp.dot(y_b, wq_ref[...], preferred_element_type=jnp.float32) + bq_ref[...]
    k = jnp.dot(f_b, wk_ref[...], preferred_element_type=jnp.float32) + bk_ref[...]
    v = jnp.dot(f_b, wv_ref[...], preferred_element_type=jnp.float32) + bv_ref[...]

    q3 = q.astype(jnp.bfloat16).reshape(tb, lq, D)   # leading-dim split only (cheap)
    k3 = k.astype(jnp.bfloat16).reshape(tb, lk, D)
    v3 = v.astype(jnp.bfloat16).reshape(tb, lk, D)

    # --- Per-head scaled dot-product attention, batched over the batch dim.
    #     (Unrolled head loop: proven-to-lower path; heads are few.) ---
    head_outs = []
    for h in range(n_heads):
        sl = slice(h * d_k, (h + 1) * d_k)
        qh, kh, vh = q3[:, :, sl], k3[:, :, sl], v3[:, :, sl]
        s = jnp.einsum('bqd,bkd->bqk', qh, kh,
                       preferred_element_type=jnp.float32)      # scale already folded in
        s = s - jnp.max(s, axis=-1, keepdims=True)
        p = jnp.exp(s)
        # approx reciprocal runs on the EUP slot; use approx=False for tighter parity.
        p = p * pl.reciprocal(jnp.sum(p, axis=-1, keepdims=True), approx=True)
        head_outs.append(jnp.einsum('bqk,bkd->bqd', p.astype(jnp.bfloat16), vh,
                                    preferred_element_type=jnp.float32))

    # --- Single fused output projection on the concatenated heads. ---
    attn = jnp.concatenate(head_outs, axis=-1).reshape(rq, D).astype(jnp.bfloat16)
    attn_out = jnp.dot(attn, wo_ref[...], preferred_element_type=jnp.float32) + bo_ref[...]

    # --- Residual (f32). Dropout is identity at inference. ---
    o_ref[...] = (x + attn_out).reshape(tb, lq, D)


def prepare_params(params, *, n_heads):
    """One-time parameter prep (hoisted out of the per-call hot path):
    transpose to (in, out), fold 1/sqrt(d_k) into Wq/bq, cast weights to bf16."""
    wq, bq, wk, bk, wv, bv, wo, bo, gamma, beta = params
    D = wq.shape[0]
    d_k = D // n_heads
    scale = 1.0 / math.sqrt(d_k)
    return dict(
        wq_t=(wq.T * scale).astype(jnp.bfloat16),
        bq=(bq * scale).astype(jnp.float32),
        wk_t=wk.T.astype(jnp.bfloat16),
        bk=bk.astype(jnp.float32),
        wv_t=wv.T.astype(jnp.bfloat16),
        bv=bv.astype(jnp.float32),
        wo_t=wo.T.astype(jnp.bfloat16),
        bo=bo.astype(jnp.float32),
        gamma=gamma.astype(jnp.float32),
        beta=beta.astype(jnp.float32),
    )


def _pick_tile_b(B, Lq, target_rows=256):
    """Largest divisor of B such that TILE_B * Lq <= target_rows (>= 1)."""
    best = 1
    for t in range(1, B + 1):
        if B % t == 0 and t * Lq <= target_rows:
            best = t
    return best


def mha_ff2(x, feats, prepped, *, n_heads, eps=1e-6, target_rows=256):
    """x: (B, Lq, D) f32, feats: (B, Lk, D) f32, prepped = prepare_params(...)."""
    B, Lq, D = x.shape
    _, Lk, _ = feats.shape
    assert D % n_heads == 0
    d_k = D // n_heads

    tile_b = _pick_tile_b(B, Lq, target_rows)
    grid = (B // tile_b,)

    kernel = functools.partial(_mha_ff2_kernel, n_heads=n_heads, d_k=d_k, eps=eps)

    def tiled(shape):
        return pl.BlockSpec(shape, lambda g: (g, 0, 0))

    def resident(shape):
        # Grid-invariant operand: constant block index => stays resident in VMEM.
        # (If profiling shows these double-buffered, add pipeline_mode=pl.Buffered(1).)
        return pl.BlockSpec(shape, lambda g: (0,) * len(shape))

    in_specs = [
        tiled((tile_b, Lq, D)),    # x tile
        tiled((tile_b, Lk, D)),    # feats tile (same batch group as x)
        resident((D, D)),          # Wq^T (scale folded, bf16)
        resident((1, D)),          # bq (scale folded)
        resident((D, D)),          # Wk^T
        resident((1, D)),          # bk
        resident((D, D)),          # Wv^T
        resident((1, D)),          # bv
        resident((D, D)),          # Wo^T
        resident((1, D)),          # bo
        resident((1, D)),          # LN gamma
        resident((1, D)),          # LN beta
    ]

    flops = (2 * B * Lq * D * D                 # Q projection
             + 2 * 2 * B * Lk * D * D           # K and V projections
             + 2 * 2 * B * n_heads * Lq * Lk * d_k  # QK^T and PV
             + 2 * B * Lq * D * D)              # output projection
    transcendentals = B * n_heads * Lq * Lk     # softmax exps
    bytes_accessed = (4 * (x.size + feats.size + B * Lq * D)   # f32 activations in/out
                      + 2 * 4 * D * D                           # bf16 weights
                      + 4 * 6 * D)                              # biases / LN params

    out = pl.pallas_call(
        kernel,
        out_shape=jax.ShapeDtypeStruct((B, Lq, D), jnp.float32),
        grid=grid,
        in_specs=in_specs,
        out_specs=pl.BlockSpec((tile_b, Lq, D), lambda g: (g, 0, 0)),
        compiler_params=pltpu.CompilerParams(
            dimension_semantics=("parallel",),          # shards steps across TCs on v7x
            vmem_limit_bytes=48 * 1024 * 1024,          # headroom on v7x (64 MiB physical),
        ),                                              # raises v5e's 16 MiB scoped default
        cost_estimate=pl.CostEstimate(flops=int(flops),
                                      transcendentals=int(transcendentals),
                                      bytes_accessed=int(bytes_accessed)),
    )(x, feats,
      prepped['wq_t'], prepped['bq'], prepped['wk_t'], prepped['bk'],
      prepped['wv_t'], prepped['bv'], prepped['wo_t'], prepped['bo'],
      prepped['gamma'], prepped['beta'])
    return out


def init_params(key, d_model):
    ks = jax.random.split(key, 4)
    scale = 0.02
    wq = scale * jax.random.normal(ks[0], (d_model, d_model), jnp.float32)
    wk = scale * jax.random.normal(ks[1], (d_model, d_model), jnp.float32)
    wv = scale * jax.random.normal(ks[2], (d_model, d_model), jnp.float32)
    wo = scale * jax.random.normal(ks[3], (d_model, d_model), jnp.float32)
    bq = jnp.zeros((1, d_model), jnp.float32)
    bk = jnp.zeros((1, d_model), jnp.float32)
    bv = jnp.zeros((1, d_model), jnp.float32)
    bo = jnp.zeros((1, d_model), jnp.float32)
    gamma = jnp.ones((1, d_model), jnp.float32)
    beta = jnp.zeros((1, d_model), jnp.float32)
    return (wq, bq, wk, bk, wv, bv, wo, bo, gamma, beta)


def _reference(x, feats, params, *, n_heads, eps=1e-6):
    """Pure-JAX reference matching the PyTorch module (eval mode), f32 throughout."""
    wq, bq, wk, bk, wv, bv, wo, bo, gamma, beta = params
    B, Lq, D = x.shape
    Lk = feats.shape[1]
    d_k = D // n_heads
    mean = x.mean(-1, keepdims=True)
    var = ((x - mean) ** 2).sum(-1, keepdims=True) / (D - 1)   # unbiased std
    y = gamma * (x - mean) / (jnp.sqrt(var) + eps) + beta
    q = y @ wq.T + bq
    k = feats @ wk.T + bk
    v = feats @ wv.T + bv

    def split(t, L):
        return t.reshape(B, L, n_heads, d_k).transpose(0, 2, 1, 3)

    qh, kh, vh = split(q, Lq), split(k, Lk), split(v, Lk)
    s = jnp.einsum('bhqd,bhkd->bhqk', qh, kh) / math.sqrt(d_k)
    p = jax.nn.softmax(s, axis=-1)
    o = jnp.einsum('bhqk,bhkd->bhqd', p, vh).transpose(0, 2, 1, 3).reshape(B, Lq, D)
    return x + (o @ wo.T + bo)


def _run_case(key, B, Lq, Lk, d_model, n_heads, tol):
    kx, kf, kp = jax.random.split(key, 3)
    x = jax.random.normal(kx, (B, Lq, d_model), jnp.float32)
    feats = jax.random.normal(kf, (B, Lk, d_model), jnp.float32)
    params = init_params(kp, d_model)
    prepped = prepare_params(params, n_heads=n_heads)     # one-time param prep

    out = mha_ff2(x, feats, prepped, n_heads=n_heads)
    jax.block_until_ready(out)
    assert out.shape == (B, Lq, d_model)

    ref = _reference(x, feats, params, n_heads=n_heads)
    err = float(jnp.max(jnp.abs(out - ref)))
    assert jnp.allclose(out, ref, atol=tol, rtol=tol), f"max abs err {err}"
    return err


if __name__ == "__main__":
    key = jax.random.PRNGKey(0)
    k1, k2 = jax.random.split(key, 2)

    # Small config matching the module's toy sizes (grid collapses to 1 step).
    _run_case(k1, B=2, Lq=8, Lk=8, d_model=32, n_heads=4, tol=2e-3)

    # Slightly larger, lane-dense config (D % 128 == 0) that exercises a multi-step
    # parallel grid (B=8, TILE_B=4 -> grid=(2,)).
    _run_case(k2, B=8, Lq=64, Lk=32, d_model=128, n_heads=8, tol=2e-3)

    print("KERNEL_OK")
</pallas_src>

<mosaic_0001>
module attributes {stable_mosaic.version = 11 : i64} {
  func.func @_mha_ff2_kernel(%arg0: i32, %arg1: memref<2x8x32xf32, #tpu.memory_space<vmem>>, %arg2: memref<2x8x32xf32, #tpu.memory_space<vmem>>, %arg3: memref<32x32xbf16, #tpu.memory_space<vmem>>, %arg4: memref<1x32xf32, #tpu.memory_space<vmem>>, %arg5: memref<32x32xbf16, #tpu.memory_space<vmem>>, %arg6: memref<1x32xf32, #tpu.memory_space<vmem>>, %arg7: memref<32x32xbf16, #tpu.memory_space<vmem>>, %arg8: memref<1x32xf32, #tpu.memory_space<vmem>>, %arg9: memref<32x32xbf16, #tpu.memory_space<vmem>>, %arg10: memref<1x32xf32, #tpu.memory_space<vmem>>, %arg11: memref<1x32xf32, #tpu.memory_space<vmem>>, %arg12: memref<1x32xf32, #tpu.memory_space<vmem>>, %arg13: memref<2x8x32xf32, #tpu.memory_space<vmem>>) attributes {dimension_semantics = [#tpu.dimension_semantics<parallel>], iteration_bounds = array<i64: 1>, scalar_prefetch = 0 : i64, scratch_operands = 0 : i64, tpu.core_type = #tpu.core_type<tc>, window_params = [{transform_indices = @transform_0, window_bounds = array<i64: 2, 8, 32>}, {transform_indices = @transform_1, window_bounds = array<i64: 2, 8, 32>}, {pipeline_mode = #tpu.pipeline_mode<synchronous>, transform_indices = @transform_2, window_bounds = array<i64: 32, 32>}, {pipeline_mode = #tpu.pipeline_mode<synchronous>, transform_indices = @transform_3, window_bounds = array<i64: 1, 32>}, {pipeline_mode = #tpu.pipeline_mode<synchronous>, transform_indices = @transform_4, window_bounds = array<i64: 32, 32>}, {pipeline_mode = #tpu.pipeline_mode<synchronous>, transform_indices = @transform_5, window_bounds = array<i64: 1, 32>}, {pipeline_mode = #tpu.pipeline_mode<synchronous>, transform_indices = @transform_6, window_bounds = array<i64: 32, 32>}, {pipeline_mode = #tpu.pipeline_mode<synchronous>, transform_indices = @transform_7, window_bounds = array<i64: 1, 32>}, {pipeline_mode = #tpu.pipeline_mode<synchronous>, transform_indices = @transform_8, window_bounds = array<i64: 32, 32>}, {pipeline_mode = #tpu.pipeline_mode<synchronous>, transform_indices = @transform_9, window_bounds = array<i64: 1, 32>}, {pipeline_mode = #tpu.pipeline_mode<synchronous>, transform_indices = @transform_10, window_bounds = array<i64: 1, 32>}, {pipeline_mode = #tpu.pipeline_mode<synchronous>, transform_indices = @transform_11, window_bounds = array<i64: 1, 32>}, {transform_indices = @transform_12, window_bounds = array<i64: 2, 8, 32>}]} {
    %c0 = arith.constant 0 : index
    %c0_0 = arith.constant 0 : index
    %c0_1 = arith.constant 0 : index
    %0 = vector.load %arg1[%c0, %c0_0, %c0_1] : memref<2x8x32xf32, #tpu.memory_space<vmem>>, vector<2x8x32xf32>
    %1 = vector.shape_cast %0 : vector<2x8x32xf32> to vector<16x32xf32>
    %c0_2 = arith.constant 0 : index
    %c0_3 = arith.constant 0 : index
    %c0_4 = arith.constant 0 : index
    %2 = vector.load %arg2[%c0_2, %c0_3, %c0_4] : memref<2x8x32xf32, #tpu.memory_space<vmem>>, vector<2x8x32xf32>
    %3 = vector.shape_cast %2 : vector<2x8x32xf32> to vector<16x32xf32>
    %cst = arith.constant dense<0.000000e+00> : vector<16xf32>
    %4 = vector.multi_reduction <add>, %1, %cst [1] : vector<16x32xf32> to vector<16xf32>
    %5 = vector.shape_cast %4 : vector<16xf32> to vector<16x1xf32>
    %cst_5 = arith.constant 3.125000e-02 : f32
    %6 = vector.broadcast %cst_5 : f32 to vector<16x1xf32>
    %7 = arith.mulf %5, %6 : vector<16x1xf32>
    %8 = vector.broadcast %7 : vector<16x1xf32> to vector<16x32xf32>
    %9 = arith.subf %1, %8 : vector<16x32xf32>
    %10 = arith.mulf %9, %9 : vector<16x32xf32>
    %cst_6 = arith.constant dense<0.000000e+00> : vector<16xf32>
    %11 = vector.multi_reduction <add>, %10, %cst_6 [1] : vector<16x32xf32> to vector<16xf32>
    %12 = vector.shape_cast %11 : vector<16xf32> to vector<16x1xf32>
    %cst_7 = arith.constant 0.0322580636 : f32
    %13 = vector.broadcast %cst_7 : f32 to vector<16x1xf32>
    %14 = arith.mulf %12, %13 : vector<16x1xf32>
    %15 = math.sqrt %14 : vector<16x1xf32>
    %cst_8 = arith.constant 9.99999997E-7 : f32
    %16 = vector.broadcast %cst_8 : f32 to vector<16x1xf32>
    %17 = arith.addf %15, %16 : vector<16x1xf32>
    %18 = tpu.reciprocal %17 : vector<16x1xf32> -> vector<16x1xf32>
    %c0_9 = arith.constant 0 : index
    %c0_10 = arith.constant 0 : index
    %19 = vector.load %arg11[%c0_9, %c0_10] : memref<1x32xf32, #tpu.memory_space<vmem>>, vector<1x32xf32>
    %20 = vector.broadcast %18 : vector<16x1xf32> to vector<16x32xf32>
    %21 = arith.mulf %9, %20 : vector<16x32xf32>
    %22 = vector.broadcast %19 : vector<1x32xf32> to vector<16x32xf32>
    %23 = arith.mulf %22, %21 : vector<16x32xf32>
    %c0_11 = arith.constant 0 : index
    %c0_12 = arith.constant 0 : index
    %24 = vector.load %arg12[%c0_11, %c0_12] : memref<1x32xf32, #tpu.memory_space<vmem>>, vector<1x32xf32>
    %25 = vector.broadcast %24 : vector<1x32xf32> to vector<16x32xf32>
    %26 = arith.addf %23, %25 : vector<16x32xf32>
    %27 = arith.truncf %26 : vector<16x32xf32> to vector<16x32xbf16>
    %28 = arith.truncf %3 : vector<16x32xf32> to vector<16x32xbf16>
    %c0_13 = arith.constant 0 : index
    %c0_14 = arith.constant 0 : index
    %29 = vector.load %arg3[%c0_13, %c0_14] : memref<32x32xbf16, #tpu.memory_space<vmem>>, vector<32x32xbf16>
    %cst_15 = arith.constant dense<0.000000e+00> : vector<16x32xf32>
    %30 = tpu.matmul %27, %29, %cst_15 {dimension_numbers = #tpu.dot_dimension_numbers<[1], [0], [0], [1], [0, 0, 1, 1], [], []>} : vector<16x32xbf16>, vector<32x32xbf16>, vector<16x32xf32> -> vector<16x32xf32>
    %c0_16 = arith.constant 0 : index
    %c0_17 = arith.constant 0 : index
    %31 = vector.load %arg4[%c0_16, %c0_17] : memref<1x32xf32, #tpu.memory_space<vmem>>, vector<1x32xf32>
    %32 = vector.broadcast %31 : vector<1x32xf32> to vector<16x32xf32>
    %33 = arith.addf %30, %32 : vector<16x32xf32>
    %c0_18 = arith.constant 0 : index
    %c0_19 = arith.constant 0 : index
    %34 = vector.load %arg5[%c0_18, %c0_19] : memref<32x32xbf16, #tpu.memory_space<vmem>>, vector<32x32xbf16>
    %cst_20 = arith.constant dense<0.000000e+00> : vector<16x32xf32>
    %35 = tpu.matmul %28, %34, %cst_20 {dimension_numbers = #tpu.dot_dimension_numbers<[1], [0], [0], [1], [0, 0, 1, 1], [], []>} : vector<16x32xbf16>, vector<32x32xbf16>, vector<16x32xf32> -> vector<16x32xf32>
    %c0_21 = arith.constant 0 : index
    %c0_22 = arith.constant 0 : index
    %36 = vector.load %arg6[%c0_21, %c0_22] : memref<1x32xf32, #tpu.memory_space<vmem>>, vector<1x32xf32>
    %37 = vector.broadcast %36 : vector<1x32xf32> to vector<16x32xf32>
    %38 = arith.addf %35, %37 : vector<16x32xf32>
    %c0_23 = arith.constant 0 : index
    %c0_24 = arith.constant 0 : index
    %39 = vector.load %arg7[%c0_23, %c0_24] : memref<32x32xbf16, #tpu.memory_space<vmem>>, vector<32x32xbf16>
    %cst_25 = arith.constant dense<0.000000e+00> : vector<16x32xf32>
    %40 = tpu.matmul %28, %39, %cst_25 {dimension_numbers = #tpu.dot_dimension_numbers<[1], [0], [0], [1], [0, 0, 1, 1], [], []>} : vector<16x32xbf16>, vector<32x32xbf16>, vector<16x32xf32> -> vector<16x32xf32>
    %c0_26 = arith.constant 0 : index
    %c0_27 = arith.constant 0 : index
    %41 = vector.load %arg8[%c0_26, %c0_27] : memref<1x32xf32, #tpu.memory_space<vmem>>, vector<1x32xf32>
    %42 = vector.broadcast %41 : vector<1x32xf32> to vector<16x32xf32>
    %43 = arith.addf %40, %42 : vector<16x32xf32>
    %44 = arith.truncf %33 : vector<16x32xf32> to vector<16x32xbf16>
    %45 = vector.shape_cast %44 : vector<16x32xbf16> to vector<2x8x32xbf16>
    %46 = arith.truncf %38 : vector<16x32xf32> to vector<16x32xbf16>
    %47 = vector.shape_cast %46 : vector<16x32xbf16> to vector<2x8x32xbf16>
    %48 = arith.truncf %43 : vector<16x32xf32> to vector<16x32xbf16>
    %49 = vector.shape_cast %48 : vector<16x32xbf16> to vector<2x8x32xbf16>
    %50 = vector.extract_strided_slice %45 {offsets = [0, 0, 0], sizes = [2, 8, 8], strides = [1, 1, 1]} : vector<2x8x32xbf16> to vector<2x8x8xbf16>
    %51 = vector.extract_strided_slice %47 {offsets = [0, 0, 0], sizes = [2, 8, 8], strides = [1, 1, 1]} : vector<2x8x32xbf16> to vector<2x8x8xbf16>
    %52 = vector.extract_strided_slice %49 {offsets = [0, 0, 0], sizes = [2, 8, 8], strides = [1, 1, 1]} : vector<2x8x32xbf16> to vector<2x8x8xbf16>
    "tpu.trace_start"() <{level = 10 : i32, message = "bqd,bkd->bqk"}> : () -> ()
    %cst_28 = arith.constant dense<0.000000e+00> : vector<2x8x8xf32>
    %53 = tpu.matmul %50, %51, %cst_28 {dimension_numbers = #tpu.dot_dimension_numbers<[2], [2], [1], [1], [0, 0, 0, 1, 1, 1], [0], [0]>} : vector<2x8x8xbf16>, vector<2x8x8xbf16>, vector<2x8x8xf32> -> vector<2x8x8xf32>
    "tpu.trace_stop"() : () -> ()
    %cst_29 = arith.constant dense<0xFF800000> : vector<2x8xf32>
    %54 = vector.multi_reduction <maximumf>, %53, %cst_29 [2] : vector<2x8x8xf32> to vector<2x8xf32>
    %55 = vector.shape_cast %54 : vector<2x8xf32> to vector<2x8x1xf32>
    %56 = vector.broadcast %55 : vector<2x8x1xf32> to vector<2x8x8xf32>
    %57 = arith.subf %53, %56 : vector<2x8x8xf32>
    %58 = math.exp %57 : vector<2x8x8xf32>
    %cst_30 = arith.constant dense<0.000000e+00> : vector<2x8xf32>
    %59 = vector.multi_reduction <add>, %58, %cst_30 [2] : vector<2x8x8xf32> to vector<2x8xf32>
    %60 = vector.shape_cast %59 : vector<2x8xf32> to vector<2x8x1xf32>
    %61 = tpu.reciprocal %60 {approx = true} : vector<2x8x1xf32> -> vector<2x8x1xf32>
    %62 = vector.broadcast %61 : vector<2x8x1xf32> to vector<2x8x8xf32>
    %63 = arith.mulf %58, %62 : vector<2x8x8xf32>
    %64 = arith.truncf %63 : vector<2x8x8xf32> to vector<2x8x8xbf16>
    "tpu.trace_start"() <{level = 10 : i32, message = "bqk,bkd->bqd"}> : () -> ()
    %cst_31 = arith.constant dense<0.000000e+00> : vector<2x8x8xf32>
    %65 = tpu.matmul %64, %52, %cst_31 {dimension_numbers = #tpu.dot_dimension_numbers<[2], [1], [1], [2], [0, 0, 0, 1, 1, 2], [0], [0]>} : vector<2x8x8xbf16>, vector<2x8x8xbf16>, vector<2x8x8xf32> -> vector<2x8x8xf32>
    "tpu.trace_stop"() : () -> ()
    %66 = vector.extract_strided_slice %45 {offsets = [0, 0, 8], sizes = [2, 8, 8], strides = [1, 1, 1]} : vector<2x8x32xbf16> to vector<2x8x8xbf16>
    %67 = vector.extract_strided_slice %47 {offsets = [0, 0, 8], sizes = [2, 8, 8], strides = [1, 1, 1]} : vector<2x8x32xbf16> to vector<2x8x8xbf16>
    %68 = vector.extract_strided_slice %49 {offsets = [0, 0, 8], sizes = [2, 8, 8], strides = [1, 1, 1]} : vector<2x8x32xbf16> to vector<2x8x8xbf16>
    "tpu.trace_start"() <{level = 10 : i32, message = "bqd,bkd->bqk"}> : () -> ()
    %cst_32 = arith.constant dense<0.000000e+00> : vector<2x8x8xf32>
    %69 = tpu.matmul %66, %67, %cst_32 {dimension_numbers = #tpu.dot_dimension_numbers<[2], [2], [1], [1], [0, 0, 0, 1, 1, 1], [0], [0]>} : vector<2x8x8xbf16>, vector<2x8x8xbf16>, vector<2x8x8xf32> -> vector<2x8x8xf32>
    "tpu.trace_stop"() : () -> ()
    %cst_33 = arith.constant dense<0xFF800000> : vector<2x8xf32>
    %70 = vector.multi_reduction <maximumf>, %69, %cst_33 [2] : vector<2x8x8xf32> to vector<2x8xf32>
    %71 = vector.shape_cast %70 : vector<2x8xf32> to vector<2x8x1xf32>
    %72 = vector.broadcast %71 : vector<2x8x1xf32> to vector<2x8x8xf32>
    %73 = arith.subf %69, %72 : vector<2x8x8xf32>
    %74 = math.exp %73 : vector<2x8x8xf32>
    %cst_34 = arith.constant dense<0.000000e+00> : vector<2x8xf32>
    %75 = vector.multi_reduction <add>, %74, %cst_34 [2] : vector<2x8x8xf32> to vector<2x8xf32>
    %76 = vector.shape_cast %75 : vector<2x8xf32> to vector<2x8x1xf32>
    %77 = tpu.reciprocal %76 {approx = true} : vector<2x8x1xf32> -> vector<2x8x1xf32>
    %78 = vector.broadcast %77 : vector<2x8x1xf32> to vector<2x8x8xf32>
    %79 = arith.mulf %74, %78 : vector<2x8x8xf32>
    %80 = arith.truncf %79 : vector<2x8x8xf32> to vector<2x8x8xbf16>
    "tpu.trace_start"() <{level = 10 : i32, message = "bqk,bkd->bqd"}> : () -> ()
    %cst_35 = arith.constant dense<0.000000e+00> : vector<2x8x8xf32>
    %81 = tpu.matmul %80, %68, %cst_35 {dimension_numbers = #tpu.dot_dimension_numbers<[2], [1], [1], [2], [0, 0, 0, 1, 1, 2], [0], [0]>} : vector<2x8x8xbf16>, vector<2x8x8xbf16>, vector<2x8x8xf32> -> vector<2x8x8xf32>
    "tpu.trace_stop"() : () -> ()
    %82 = vector.extract_strided_slice %45 {offsets = [0, 0, 16], sizes = [2, 8, 8], strides = [1, 1, 1]} : vector<2x8x32xbf16> to vector<2x8x8xbf16>
    %83 = vector.extract_strided_slice %47 {offsets = [0, 0, 16], sizes = [2, 8, 8], strides = [1, 1, 1]} : vector<2x8x32xbf16> to vector<2x8x8xbf16>
    %84 = vector.extract_strided_slice %49 {offsets = [0, 0, 16], sizes = [2, 8, 8], strides = [1, 1, 1]} : vector<2x8x32xbf16> to vector<2x8x8xbf16>
    "tpu.trace_start"() <{level = 10 : i32, message = "bqd,bkd->bqk"}> : () -> ()
    %cst_36 = arith.constant dense<0.000000e+00> : vector<2x8x8xf32>
    %85 = tpu.matmul %82, %83, %cst_36 {dimension_numbers = #tpu.dot_dimension_numbers<[2], [2], [1], [1], [0, 0, 0, 1, 1, 1], [0], [0]>} : vector<2x8x8xbf16>, vector<2x8x8xbf16>, vector<2x8x8xf32> -> vector<2x8x8xf32>
    "tpu.trace_stop"() : () -> ()
    %cst_37 = arith.constant dense<0xFF800000> : vector<2x8xf32>
    %86 = vector.multi_reduction <maximumf>, %85, %cst_37 [2] : vector<2x8x8xf32> to vector<2x8xf32>
    %87 = vector.shape_cast %86 : vector<2x8xf32> to vector<2x8x1xf32>
    %88 = vector.broadcast %87 : vector<2x8x1xf32> to vector<2x8x8xf32>
    %89 = arith.subf %85, %88 : vector<2x8x8xf32>
    %90 = math.exp %89 : vector<2x8x8xf32>
    %cst_38 = arith.constant dense<0.000000e+00> : vector<2x8xf32>
    %91 = vector.multi_reduction <add>, %90, %cst_38 [2] : vector<2x8x8xf32> to vector<2x8xf32>
    %92 = vector.shape_cast %91 : vector<2x8xf32> to vector<2x8x1xf32>
    %93 = tpu.reciprocal %92 {approx = true} : vector<2x8x1xf32> -> vector<2x8x1xf32>
    %94 = vector.broadcast %93 : vector<2x8x1xf32> to vector<2x8x8xf32>
    %95 = arith.mulf %90, %94 : vector<2x8x8xf32>
    %96 = arith.truncf %95 : vector<2x8x8xf32> to vector<2x8x8xbf16>
    "tpu.trace_start"() <{level = 10 : i32, message = "bqk,bkd->bqd"}> : () -> ()
    %cst_39 = arith.constant dense<0.000000e+00> : vector<2x8x8xf32>
    %97 = tpu.matmul %96, %84, %cst_39 {dimension_numbers = #tpu.dot_dimension_numbers<[2], [1], [1], [2], [0, 0, 0, 1, 1, 2], [0], [0]>} : vector<2x8x8xbf16>, vector<2x8x8xbf16>, vector<2x8x8xf32> -> vector<2x8x8xf32>
    "tpu.trace_stop"() : () -> ()
    %98 = vector.extract_strided_slice %45 {offsets = [0, 0, 24], sizes = [2, 8, 8], strides = [1, 1, 1]} : vector<2x8x32xbf16> to vector<2x8x8xbf16>
    %99 = vector.extract_strided_slice %47 {offsets = [0, 0, 24], sizes = [2, 8, 8], strides = [1, 1, 1]} : vector<2x8x32xbf16> to vector<2x8x8xbf16>
    %100 = vector.extract_strided_slice %49 {offsets = [0, 0, 24], sizes = [2, 8, 8], strides = [1, 1, 1]} : vector<2x8x32xbf16> to vector<2x8x8xbf16>
    "tpu.trace_start"() <{level = 10 : i32, message = "bqd,bkd->bqk"}> : () -> ()
    %cst_40 = arith.constant dense<0.000000e+00> : vector<2x8x8xf32>
    %101 = tpu.matmul %98, %99, %cst_40 {dimension_numbers = #tpu.dot_dimension_numbers<[2], [2], [1], [1], [0, 0, 0, 1, 1, 1], [0], [0]>} : vector<2x8x8xbf16>, vector<2x8x8xbf16>, vector<2x8x8xf32> -> vector<2x8x8xf32>
    "tpu.trace_stop"() : () -> ()
    %cst_41 = arith.constant dense<0xFF800000> : vector<2x8xf32>
    %102 = vector.multi_reduction <maximumf>, %101, %cst_41 [2] : vector<2x8x8xf32> to vector<2x8xf32>
    %103 = vector.shape_cast %102 : vector<2x8xf32> to vector<2x8x1xf32>
    %104 = vector.broadcast %103 : vector<2x8x1xf32> to vector<2x8x8xf32>
    %105 = arith.subf %101, %104 : vector<2x8x8xf32>
    %106 = math.exp %105 : vector<2x8x8xf32>
    %cst_42 = arith.constant dense<0.000000e+00> : vector<2x8xf32>
    %107 = vector.multi_reduction <add>, %106, %cst_42 [2] : vector<2x8x8xf32> to vector<2x8xf32>
    %108 = vector.shape_cast %107 : vector<2x8xf32> to vector<2x8x1xf32>
    %109 = tpu.reciprocal %108 {approx = true} : vector<2x8x1xf32> -> vector<2x8x1xf32>
    %110 = vector.broadcast %109 : vector<2x8x1xf32> to vector<2x8x8xf32>
    %111 = arith.mulf %106, %110 : vector<2x8x8xf32>
    %112 = arith.truncf %111 : vector<2x8x8xf32> to vector<2x8x8xbf16>
    "tpu.trace_start"() <{level = 10 : i32, message = "bqk,bkd->bqd"}> : () -> ()
    %cst_43 = arith.constant dense<0.000000e+00> : vector<2x8x8xf32>
    %113 = tpu.matmul %112, %100, %cst_43 {dimension_numbers = #tpu.dot_dimension_numbers<[2], [1], [1], [2], [0, 0, 0, 1, 1, 2], [0], [0]>} : vector<2x8x8xbf16>, vector<2x8x8xbf16>, vector<2x8x8xf32> -> vector<2x8x8xf32>
    "tpu.trace_stop"() : () -> ()
    %114 = tpu.concatenate %65, %81, %97, %113 in 2 : vector<2x8x8xf32>, vector<2x8x8xf32>, vector<2x8x8xf32>, vector<2x8x8xf32> -> vector<2x8x32xf32>
    %115 = vector.shape_cast %114 : vector<2x8x32xf32> to vector<16x32xf32>
    %116 = arith.truncf %115 : vector<16x32xf32> to vector<16x32xbf16>
    %c0_44 = arith.constant 0 : index
    %c0_45 = arith.constant 0 : index
    %117 = vector.load %arg9[%c0_44, %c0_45] : memref<32x32xbf16, #tpu.memory_space<vmem>>, vector<32x32xbf16>
    %cst_46 = arith.constant dense<0.000000e+00> : vector<16x32xf32>
    %118 = tpu.matmul %116, %117, %cst_46 {dimension_numbers = #tpu.dot_dimension_numbers<[1], [0], [0], [1], [0, 0, 1, 1], [], []>} : vector<16x32xbf16>, vector<32x32xbf16>, vector<16x32xf32> -> vector<16x32xf32>
    %c0_47 = arith.constant 0 : index
    %c0_48 = arith.constant 0 : index
    %119 = vector.load %arg10[%c0_47, %c0_48] : memref<1x32xf32, #tpu.memory_space<vmem>>, vector<1x32xf32>
    %120 = vector.broadcast %119 : vector<1x32xf32> to vector<16x32xf32>
    %121 = arith.addf %118, %120 : vector<16x32xf32>
    %122 = arith.addf %1, %121 : vector<16x32xf32>
    %123 = vector.shape_cast %122 : vector<16x32xf32> to vector<2x8x32xf32>
    %c0_49 = arith.constant 0 : index
    %c0_50 = arith.constant 0 : index
    %c0_51 = arith.constant 0 : index
    %124 = vector.load %arg13[%c0_49, %c0_50, %c0_51] : memref<2x8x32xf32, #tpu.memory_space<vmem>>, vector<2x8x32xf32>
    tpu.vector_store %arg13[%c0_49, %c0_50, %c0_51], %123 {strides = array<i32>} : memref<2x8x32xf32, #tpu.memory_space<vmem>>, vector<2x8x32xf32>,
    return
  }
  func.func @transform_0(%arg0: i32) -> (i32, i32, i32) {
    %c0_i32 = arith.constant 0 : i32
    %c0_i32_0 = arith.constant 0 : i32
    %c0_i32_1 = arith.constant 0 : i32
    return %arg0, %c0_i32, %c0_i32_0 : i32, i32, i32
  }
  func.func @transform_1(%arg0: i32) -> (i32, i32, i32) {
    %c0_i32 = arith.constant 0 : i32
    %c0_i32_0 = arith.constant 0 : i32
    %c0_i32_1 = arith.constant 0 : i32
    return %arg0, %c0_i32, %c0_i32_0 : i32, i32, i32
  }
  func.func @transform_2(%arg0: i32) -> (i32, i32) {
    %c0_i32 = arith.constant 0 : i32
    %c0_i32_0 = arith.constant 0 : i32
    %c0_i32_1 = arith.constant 0 : i32
    return %c0_i32, %c0_i32_0 : i32, i32
  }
  func.func @transform_3(%arg0: i32) -> (i32, i32) {
    %c0_i32 = arith.constant 0 : i32
    %c0_i32_0 = arith.constant 0 : i32
    %c0_i32_1 = arith.constant 0 : i32
    return %c0_i32, %c0_i32_0 : i32, i32
  }
  func.func @transform_4(%arg0: i32) -> (i32, i32) {
    %c0_i32 = arith.constant 0 : i32
    %c0_i32_0 = arith.constant 0 : i32
    %c0_i32_1 = arith.constant 0 : i32
    return %c0_i32, %c0_i32_0 : i32, i32
  }
  func.func @transform_5(%arg0: i32) -> (i32, i32) {
    %c0_i32 = arith.constant 0 : i32
    %c0_i32_0 = arith.constant 0 : i32
    %c0_i32_1 = arith.constant 0 : i32
    return %c0_i32, %c0_i32_0 : i32, i32
  }
  func.func @transform_6(%arg0: i32) -> (i32, i32) {
    %c0_i32 = arith.constant 0 : i32
    %c0_i32_0 = arith.constant 0 : i32
    %c0_i32_1 = arith.constant 0 : i32
    return %c0_i32, %c0_i32_0 : i32, i32
  }
  func.func @transform_7(%arg0: i32) -> (i32, i32) {
    %c0_i32 = arith.constant 0 : i32
    %c0_i32_0 = arith.constant 0 : i32
    %c0_i32_1 = arith.constant 0 : i32
    return %c0_i32, %c0_i32_0 : i32, i32
  }
  func.func @transform_8(%arg0: i32) -> (i32, i32) {
    %c0_i32 = arith.constant 0 : i32
    %c0_i32_0 = arith.constant 0 : i32
    %c0_i32_1 = arith.constant 0 : i32
    return %c0_i32, %c0_i32_0 : i32, i32
  }
  func.func @transform_9(%arg0: i32) -> (i32, i32) {
    %c0_i32 = arith.constant 0 : i32
    %c0_i32_0 = arith.constant 0 : i32
    %c0_i32_1 = arith.constant 0 : i32
    return %c0_i32, %c0_i32_0 : i32, i32
  }
  func.func @transform_10(%arg0: i32) -> (i32, i32) {
    %c0_i32 = arith.constant 0 : i32
    %c0_i32_0 = arith.constant 0 : i32
    %c0_i32_1 = arith.constant 0 : i32
    return %c0_i32, %c0_i32_0 : i32, i32
  }
  func.func @transform_11(%arg0: i32) -> (i32, i32) {
    %c0_i32 = arith.constant 0 : i32
    %c0_i32_0 = arith.constant 0 : i32
    %c0_i32_1 = arith.constant 0 : i32
    return %c0_i32, %c0_i32_0 : i32, i32
  }
  func.func @transform_12(%arg0: i32) -> (i32, i32, i32) {
    %c0_i32 = arith.constant 0 : i32
    %c0_i32_0 = arith.constant 0 : i32
    %c0_i32_1 = arith.constant 0 : i32
    return %arg0, %c0_i32, %c0_i32_0 : i32, i32, i32
  }
}

</mosaic_0001>

<llo_original>
// kernel: tpu_custom_call.1
$region0: #{tpu_custom_call.1}
  #allocation0 [shape = 'u32[]', space=smem, size = 0x4, offset = 0x4, fixed_abs, tag = 'smem constant byte address 0x4 - core index']
  #allocation1 [shape = 'u32[144,128]{1,0:T(1,128)}', space=vmem, size = 0x12000, scoped, tag = 'internal scratch']
  %s0 = inlined_call_operand.hbm [shape: f32[2,8,32], index: 0, kind: input, shape index: {}]
  %s1 = inlined_call_operand.hbm [shape: f32[2,8,32], index: 1, kind: input, shape index: {}]
  %s2 = inlined_call_operand.hbm [shape: bf16[32,32], index: 2, kind: input, shape index: {}]
  %s3 = inlined_call_operand.vmem [shape: f32[1,32], index: 3, kind: input, shape index: {}]
  %s4 = inlined_call_operand.hbm [shape: bf16[32,32], index: 4, kind: input, shape index: {}]
  %s5 = inlined_call_operand.vmem [shape: f32[1,32], index: 5, kind: input, shape index: {}]
  %s6 = inlined_call_operand.vmem [shape: bf16[32,32], index: 6, kind: input, shape index: {}]
  %s7 = inlined_call_operand.vmem [shape: f32[1,32], index: 7, kind: input, shape index: {}]
  %s8 = inlined_call_operand.hbm [shape: bf16[32,32], index: 8, kind: input, shape index: {}]
  %s9 = inlined_call_operand.vmem [shape: f32[1,32], index: 9, kind: input, shape index: {}]
  %s10 = inlined_call_operand.vmem [shape: f32[1,32], index: 10, kind: input, shape index: {}]
  %s11 = inlined_call_operand.vmem [shape: f32[1,32], index: 11, kind: input, shape index: {}]
  %s12 = inlined_call_operand.hbm [shape: f32[2,8,32], index: 12, kind: output, shape index: {}]
  %s13 = sld [smem:[#allocation0]]
  $region78: #{tpu_custom_call.1} parent=0
    _
  %s15 = ssub.s32 1, %s13
  %s16 = scalar_select 0, %s15, %s13
  $region1: #{tpu_custom_call.1} parent=0
    #allocation2 [shape = 'u8[8192]{0}', space=vmem, size = 0x2000, scoped, tag = 'input window, operand 0, single buffered']
    #allocation3 [shape = 's32[1]{0}', space=sflag, size = 0x4, scoped, tag = 'scoped memory for tpu_custom_call.1']
    #allocation4 [shape = 's32[1]{0}', space=sflag, size = 0x4, scoped, tag = 'scoped memory for tpu_custom_call.1']
    #allocation5 [shape = 'u8[8192]{0}', space=vmem, size = 0x2000, scoped, tag = 'input window, operand 1, single buffered']
    #allocation6 [shape = 's32[1]{0}', space=sflag, size = 0x4, scoped, tag = 'scoped memory for tpu_custom_call.1']
    #allocation7 [shape = 'u8[8192]{0}', space=vmem, size = 0x2000, scoped, tag = 'input window, operand 2, single buffered']
    #allocation8 [shape = 'u8[8192]{0}', space=vmem, size = 0x2000, scoped, tag = 'input window, operand 4, single buffered']
    #allocation9 [shape = 's32[1]{0}', space=sflag, size = 0x4, scoped, tag = 'scoped memory for tpu_custom_call.1']
    #allocation10 [shape = 'u8[8192]{0}', space=vmem, size = 0x2000, scoped, tag = 'input window, operand 8, single buffered']
    #allocation11 [shape = 'u8[8192]{0}', space=vmem, size = 0x2000, scoped, tag = 'output window, operand 0, single buffered']
    %17 = vsyncpa [#allocation3], 0
    %18 = vsyncpa [#allocation6], 0
    %19 = vsyncpa [#allocation9], 0
    %20 = vsyncpa [#allocation4], 0
    // Predicated region
    $region2: #{tpu_custom_call.1} parent=1 // pred_check
      _
    $region3: #{tpu_custom_call.1} parent=1 // pred_check_branch
      %22 = sbr.rel (0) target = $region5
    $region4: #{tpu_custom_call.1} parent=1 // pred_region
      %s24 = ssub.s32 256, 256
      %25 = vsyncadd [#allocation3], %s24
      %s26 = sshll.u32 [#allocation2], 4
      %s27 = int_to_ptr.vmem [resolvable:$true] %s26
      %32 = dma.hbm_to_vmem [thread:$0]  %s0, 256, %s27, [#allocation3], 128, 128, 8
    $region5: #{tpu_custom_call.1} parent=1 // pred_fallthru
      _
    // Predicated region
    $region6: #{tpu_custom_call.1} parent=1 // pred_check
      _
    $region7: #{tpu_custom_call.1} parent=1 // pred_check_branch
      %34 = sbr.rel (0) target = $region9
    $region8: #{tpu_custom_call.1} parent=1 // pred_region
      %s36 = ssub.s32 256, 256
      %37 = vsyncadd [#allocation6], %s36
      %s38 = sshll.u32 [#allocation5], 4
      %s39 = int_to_ptr.vmem [resolvable:$true] %s38
      %44 = dma.hbm_to_vmem [thread:$0]  %s1, 256, %s39, [#allocation6], 128, 128, 8
    $region9: #{tpu_custom_call.1} parent=1 // pred_fallthru
      _
    // Predicated region
    $region10: #{tpu_custom_call.1} parent=1 // pred_check
      _
    $region11: #{tpu_custom_call.1} parent=1 // pred_check_branch
      %46 = sbr.rel (0) target = $region13
    $region12: #{tpu_custom_call.1} parent=1 // pred_region
      %s48 = ssub.s32 256, 256
      %49 = vsyncadd [#allocation6], %s48
      %s50 = sshll.u32 [#allocation7], 4
      %s51 = int_to_ptr.vmem [resolvable:$true] %s50
      %56 = dma.hbm_to_vmem [thread:$0]  %s2, 256, %s51, [#allocation6], 64, 64, 4
    $region13: #{tpu_custom_call.1} parent=1 // pred_fallthru
      _
    // Predicated region
    $region14: #{tpu_custom_call.1} parent=1 // pred_check
      _
    $region15: #{tpu_custom_call.1} parent=1 // pred_check_branch
      %58 = sbr.rel (0) target = $region17
    $region16: #{tpu_custom_call.1} parent=1 // pred_region
      _
    $region17: #{tpu_custom_call.1} parent=1 // pred_fallthru
      _
    // Predicated region
    $region18: #{tpu_custom_call.1} parent=1 // pred_check
      _
    $region19: #{tpu_custom_call.1} parent=1 // pred_check_branch
      %60 = sbr.rel (0) target = $region21
    $region20: #{tpu_custom_call.1} parent=1 // pred_region
      %s62 = ssub.s32 256, 256
      %63 = vsyncadd [#allocation9], %s62
      %s64 = sshll.u32 [#allocation8], 4
      %s65 = int_to_ptr.vmem [resolvable:$true] %s64
      %70 = dma.hbm_to_vmem [thread:$0]  %s4, 256, %s65, [#allocation9], 64, 64, 4
    $region21: #{tpu_custom_call.1} parent=1 // pred_fallthru
      _
    // Predicated region
    $region22: #{tpu_custom_call.1} parent=1 // pred_check
      _
    $region23: #{tpu_custom_call.1} parent=1 // pred_check_branch
      %72 = sbr.rel (0) target = $region25
    $region24: #{tpu_custom_call.1} parent=1 // pred_region
      _
    $region25: #{tpu_custom_call.1} parent=1 // pred_fallthru
      _
    // Predicated region
    $region26: #{tpu_custom_call.1} parent=1 // pred_check
      _
    $region27: #{tpu_custom_call.1} parent=1 // pred_check_branch
      %74 = sbr.rel (0) target = $region29
    $region28: #{tpu_custom_call.1} parent=1 // pred_region
      _
    $region29: #{tpu_custom_call.1} parent=1 // pred_fallthru
      _
    // Predicated region
    $region30: #{tpu_custom_call.1} parent=1 // pred_check
      _
    $region31: #{tpu_custom_call.1} parent=1 // pred_check_branch
      %76 = sbr.rel (0) target = $region33
    $region32: #{tpu_custom_call.1} parent=1 // pred_region
      _
    $region33: #{tpu_custom_call.1} parent=1 // pred_fallthru
      _
    // Predicated region
    $region34: #{tpu_custom_call.1} parent=1 // pred_check
      _
    $region35: #{tpu_custom_call.1} parent=1 // pred_check_branch
      %78 = sbr.rel (0) target = $region37
    $region36: #{tpu_custom_call.1} parent=1 // pred_region
      %s80 = ssub.s32 256, 256
      %81 = vsyncadd [#allocation9], %s80
      %s82 = sshll.u32 [#allocation10], 4
      %s83 = int_to_ptr.vmem [resolvable:$true] %s82
      %88 = dma.hbm_to_vmem [thread:$0]  %s8, 256, %s83, [#allocation9], 64, 64, 4
    $region37: #{tpu_custom_call.1} parent=1 // pred_fallthru
      _
    // Predicated region
    $region38: #{tpu_custom_call.1} parent=1 // pred_check
      _
    $region39: #{tpu_custom_call.1} parent=1 // pred_check_branch
      %90 = sbr.rel (0) target = $region41
    $region40: #{tpu_custom_call.1} parent=1 // pred_region
      _
    $region41: #{tpu_custom_call.1} parent=1 // pred_fallthru
      _
    // Predicated region
    $region42: #{tpu_custom_call.1} parent=1 // pred_check
      _
    $region43: #{tpu_custom_call.1} parent=1 // pred_check_branch
      %92 = sbr.rel (0) target = $region45
    $region44: #{tpu_custom_call.1} parent=1 // pred_region
      _
    $region45: #{tpu_custom_call.1} parent=1 // pred_fallthru
      _
    // Predicated region
    $region46: #{tpu_custom_call.1} parent=1 // pred_check
      _
    $region47: #{tpu_custom_call.1} parent=1 // pred_check_branch
      %94 = sbr.rel (0) target = $region49
    $region48: #{tpu_custom_call.1} parent=1 // pred_region
      _
    $region49: #{tpu_custom_call.1} parent=1 // pred_fallthru
      _
    // Predicated region
    $region50: #{tpu_custom_call.1} parent=1 // pred_check
      _
    $region51: #{tpu_custom_call.1} parent=1 // pred_check_branch
      %96 = sbr.rel (0) target = $region53
    $region52: #{tpu_custom_call.1} parent=1 // pred_region
      %97 = dma.done [#allocation3], 256
    $region53: #{tpu_custom_call.1} parent=1 // pred_fallthru
      _
    // Predicated region
    $region54: #{tpu_custom_call.1} parent=1 // pred_check
      _
    $region55: #{tpu_custom_call.1} parent=1 // pred_check_branch
      %99 = sbr.rel (0) target = $region57
    $region56: #{tpu_custom_call.1} parent=1 // pred_region
      %100 = dma.done [#allocation6], 256
    $region57: #{tpu_custom_call.1} parent=1 // pred_fallthru
      _
    // Predicated region
    $region58: #{tpu_custom_call.1} parent=1 // pred_check
      _
    $region59: #{tpu_custom_call.1} parent=1 // pred_check_branch
      %102 = sbr.rel (0) target = $region61
    $region60: #{tpu_custom_call.1} parent=1 // pred_region
      %103 = dma.done [#allocation6], 256
    $region61: #{tpu_custom_call.1} parent=1 // pred_fallthru
      _
    // Predicated region
    $region62: #{tpu_custom_call.1} parent=1 // pred_check
      _
    $region63: #{tpu_custom_call.1} parent=1 // pred_check_branch
      %105 = sbr.rel (0) target = $region65
    $region64: #{tpu_custom_call.1} parent=1 // pred_region
      %106 = dma.done [#allocation9], 256
    $region65: #{tpu_custom_call.1} parent=1 // pred_fallthru
      _
    // Predicated region
    $region66: #{tpu_custom_call.1} parent=1 // pred_check
      _
    $region67: #{tpu_custom_call.1} parent=1 // pred_check_branch
      %108 = sbr.rel (0) target = $region69
    $region68: #{tpu_custom_call.1} parent=1 // pred_region
      %109 = dma.done [#allocation9], 256
    $region69: #{tpu_custom_call.1} parent=1 // pred_fallthru
      _
    %v111 = vld [vmem:[#allocation2] sm:$0xff]
    %v112 = vld [vmem:[#allocation2 + $0x8] sm:$0xff]
    %v113 = vld [vmem:[#allocation5] sm:$0xff]
    %v114 = vld [vmem:[#allocation5 + $0x8] sm:$0xff]
    %vm115 = vcmask 261120
    %v116 = vsel %vm115, %v111, 0.0
    %117 = vadd.xlane.f32.xlu0 %v116
    %v118 = vpop.xlane.xlu0 %117
    %v119 = vsel %vm115, %v112, 0.0
    %120 = vadd.xlane.f32.xlu0 %v119
    %v121 = vpop.xlane.xlu0 %120
    %v122 = vmul.f32 %v118, 0.03125
    %v123 = vmul.f32 %v121, 0.03125
    %v124 = vsub.f32 %v111, %v122
    %v125 = vsub.f32 %v112, %v123
    %v126 = vmul.f32 %v124, %v124
    %v127 = vmul.f32 %v125, %v125
    %v128 = vsel %vm115, %v126, 0.0
    %129 = vadd.xlane.f32.xlu0 %v128
    %v130 = vpop.xlane.xlu0 %129
    %v131 = vsel %vm115, %v127, 0.0
    %132 = vadd.xlane.f32.xlu0 %v131
    %v133 = vpop.xlane.xlu0 %132
    %v134 = vmul.f32 %v130, 0.032258064
    %v135 = vmul.f32 %v133, 0.032258064
    %v136 = vrsqrt.pop %v134
    %v137 = vmul.f32 %v134, %v136
    %vm138 = vcmp.eq.f32.partialorder %v134, inf
    %v139 = vsel %vm138, %v134, %v137
    %vm140 = vcmp.eq.f32.partialorder %v134, 0.0
    %v141 = vand.u32 %v134, 2147483648
    %v142 = vsel %vm140, %v141, %v139
    %v143 = vrsqrt.pop %v135
    %v144 = vmul.f32 %v135, %v143
    %vm145 = vcmp.eq.f32.partialorder %v135, inf
    %v146 = vsel %vm145, %v135, %v144
    %vm147 = vcmp.eq.f32.partialorder %v135, 0.0
    %v148 = vand.u32 %v135, 2147483648
    %v149 = vsel %vm147, %v148, %v146
    %v150 = vadd.f32 %v142, 1e-06
    %v151 = vadd.f32 %v149, 1e-06
    %v152 = vrcp.pop %v150
    %v153 = vrcp.pop %v151
    %v154 = vld [vmem:[%s10] sm:$0x1]
    %v155 = vmul.f32 %v124, %v152
    %v156 = vmul.f32 %v125, %v153
    %v158 = vlaneseq
    %v159 = vshrl.u32 %v158, 7
    %v160 = vsub.s32 0, %v159
    %v161 = vrot.slane %v154, %v160
    %v163 = vmul.f32 %v161, %v155
    %v164 = vmul.f32 %v161, %v156
    %v165 = vld [vmem:[%s11] sm:$0x1]
    %v167 = vlaneseq
    %v168 = vshrl.u32 %v167, 7
    %v169 = vsub.s32 0, %v168
    %v170 = vrot.slane %v165, %v169
    %v172 = vadd.f32 %v163, %v170
    %v173 = vadd.f32 %v164, %v170
    %v174 = vpack.c.bf16 %v173, %v172
    %v175 = vpack.c.bf16 %v114, %v113
    %v176 = vld [vmem:[#allocation7] sm:$0xf]
    %v177 = vld [vmem:[#allocation7 + $0x4] sm:$0xf]
    %v178 = vld [vmem:[#allocation7 + $0x8] sm:$0xf]
    %v179 = vld [vmem:[#allocation7 + $0xc] sm:$0xf]
    %v180 = vld [vmem:[%s3] sm:$0x1]
    %v182 = vlaneseq
    %v183 = vshrl.u32 %v182, 7
    %v184 = vsub.s32 0, %v183
    %v185 = vrot.slane %v180, %v184
    %v191 = vunpack.c.l.b16 %v176
    %v192 = vunpack.c.l.b16 %v177
    %v193 = vunpack.c.l.b16 %v178
    %v194 = vunpack.c.l.b16 %v179
    %v195 = vpack.c.b16 %v192, %v191
    %v196 = vpack.c.b16 %v194, %v193
    %v200 = vsel %vm115, %v174, 0
    %202 = vmatprep.subr.bf16.mxu0 0
    %203 = vmatpush1.bf16.msra.mxu0 %v195
    %204 = vmatprep.subr.bf16.mxu0 0
    %205 = vmatpush1.bf16.msra.mxu0 %v196
    %206 = vmatprep.subr.bf16.mxu0 0
    %207 = vmatpush1.bf16.msra.mxu0 0
    %208 = vmatprep.subr.bf16.mxu0 0
    %209 = vmatpush1.bf16.msra.mxu0 0
    %210 = vmatprep.subr.bf16.mxu0 0
    %211 = vmatpush1.bf16.msra.mxu0 0
    %212 = vmatprep.subr.bf16.mxu0 0
    %213 = vmatpush1.bf16.msra.mxu0 0
    %214 = vmatprep.subr.bf16.mxu0 0
    %215 = vmatpush1.bf16.msra.mxu0 0
    %216 = vmatprep.subr.bf16.mxu0 0
    %217 = vmatpush1.bf16.msra.mxu0 0
    %218 = vmatprep.subr.bf16.mxu0 0
    %219 = vmatpush1.bf16.msra.mxu0 0
    %220 = vmatprep.subr.bf16.mxu0 0
    %221 = vmatpush1.bf16.msra.mxu0 0
    %222 = vmatprep.subr.bf16.mxu0 0
    %223 = vmatpush1.bf16.msra.mxu0 0
    %224 = vmatprep.subr.bf16.mxu0 0
    %225 = vmatpush1.bf16.msra.mxu0 0
    %226 = vmatprep.subr.bf16.mxu0 0
    %227 = vmatpush1.bf16.msra.mxu0 0
    %228 = vmatprep.subr.bf16.mxu0 0
    %229 = vmatpush1.bf16.msra.mxu0 0
    %230 = vmatprep.subr.bf16.mxu0 0
    %231 = vmatpush1.bf16.msra.mxu0 0
    %232 = vmatprep.subr.bf16.mxu0 0
    %233 = vmatpush1.bf16.msra.mxu0 0
    %234 = vmatprep.mubr.bf16.mxu0 0
    %235 = vmatmul.mubr.bf16.gmra.mrb[0].mxu0 %v200
    %v236 = vpop.f32.mrb[0].mxu0
    %v237 = vadd.f32 %v185, %v236
    %v238 = vpop.f32.mrb[0].mxu0
    %v239 = vpop.f32.mrb[0].mxu0
    %v240 = vadd.f32 %v185, %v239
    %v241 = vpop.f32.mrb[0].mxu0
    %242 = vdwg.mxu0
    %v243 = vld [vmem:[#allocation8] sm:$0xf]
    %v244 = vld [vmem:[#allocation8 + $0x4] sm:$0xf]
    %v245 = vld [vmem:[#allocation8 + $0x8] sm:$0xf]
    %v246 = vld [vmem:[#allocation8 + $0xc] sm:$0xf]
    %v247 = vld [vmem:[%s5] sm:$0x1]
    %v249 = vlaneseq
    %v250 = vshrl.u32 %v249, 7
    %v251 = vsub.s32 0, %v250
    %v252 = vrot.slane %v247, %v251
    %v258 = vunpack.c.l.b16 %v243
    %v259 = vunpack.c.l.b16 %v244
    %v260 = vunpack.c.l.b16 %v245
    %v261 = vunpack.c.l.b16 %v246
    %v262 = vpack.c.b16 %v259, %v258
    %v263 = vpack.c.b16 %v261, %v260
    %v267 = vsel %vm115, %v175, 0
    %269 = vmatprep.subr.bf16.mxu0 0
    %270 = vmatpush1.bf16.msra.mxu0 %v262
    %271 = vmatprep.subr.bf16.mxu0 0
    %272 = vmatpush1.bf16.msra.mxu0 %v263
    %273 = vmatprep.subr.bf16.mxu0 0
    %274 = vmatpush1.bf16.msra.mxu0 0
    %275 = vmatprep.subr.bf16.mxu0 0
    %276 = vmatpush1.bf16.msra.mxu0 0
    %277 = vmatprep.subr.bf16.mxu0 0
    %278 = vmatpush1.bf16.msra.mxu0 0
    %279 = vmatprep.subr.bf16.mxu0 0
    %280 = vmatpush1.bf16.msra.mxu0 0
    %281 = vmatprep.subr.bf16.mxu0 0
    %282 = vmatpush1.bf16.msra.mxu0 0
    %283 = vmatprep.subr.bf16.mxu0 0
    %284 = vmatpush1.bf16.msra.mxu0 0
    %285 = vmatprep.subr.bf16.mxu0 0
    %286 = vmatpush1.bf16.msra.mxu0 0
    %287 = vmatprep.subr.bf16.mxu0 0
    %288 = vmatpush1.bf16.msra.mxu0 0
    %289 = vmatprep.subr.bf16.mxu0 0
    %290 = vmatpush1.bf16.msra.mxu0 0
    %291 = vmatprep.subr.bf16.mxu0 0
    %292 = vmatpush1.bf16.msra.mxu0 0
    %293 = vmatprep.subr.bf16.mxu0 0
    %294 = vmatpush1.bf16.msra.mxu0 0
    %295 = vmatprep.subr.bf16.mxu0 0
    %296 = vmatpush1.bf16.msra.mxu0 0
    %297 = vmatprep.subr.bf16.mxu0 0
    %298 = vmatpush1.bf16.msra.mxu0 0
    %299 = vmatprep.subr.bf16.mxu0 0
    %300 = vmatpush1.bf16.msra.mxu0 0
    %301 = vmatprep.mubr.bf16.mxu0 0
    %302 = vmatmul.mubr.bf16.gmra.mrb[0].mxu0 %v267
    %v303 = vpop.f32.mrb[0].mxu0
    %v304 = vadd.f32 %v252, %v303
    %v305 = vpop.f32.mrb[0].mxu0
    %v306 = vpop.f32.mrb[0].mxu0
    %v307 = vadd.f32 %v252, %v306
    %v308 = vpop.f32.mrb[0].mxu0
    %309 = vdwg.mxu0
    %v310 = vld [vmem:[%s6] sm:$0xf]
    %v311 = vld [vmem:[%s6 + $0x4] sm:$0xf]
    %v312 = vld [vmem:[%s6 + $0x8] sm:$0xf]
    %v313 = vld [vmem:[%s6 + $0xc] sm:$0xf]
    %v314 = vld [vmem:[%s7] sm:$0x1]
    %v316 = vlaneseq
    %v317 = vshrl.u32 %v316, 7
    %v318 = vsub.s32 0, %v317
    %v319 = vrot.slane %v314, %v318
    %v325 = vunpack.c.l.b16 %v310
    %v326 = vunpack.c.l.b16 %v311
    %v327 = vunpack.c.l.b16 %v312
    %v328 = vunpack.c.l.b16 %v313
    %v329 = vpack.c.b16 %v326, %v325
    %v330 = vpack.c.b16 %v328, %v327
    %333 = vmatprep.subr.bf16.mxu0 0
    %334 = vmatpush1.bf16.msra.mxu0 %v329
    %335 = vmatprep.subr.bf16.mxu0 0
    %336 = vmatpush1.bf16.msra.mxu0 %v330
    %337 = vmatprep.subr.bf16.mxu0 0
    %338 = vmatpush1.bf16.msra.mxu0 0
    %339 = vmatprep.subr.bf16.mxu0 0
    %340 = vmatpush1.bf16.msra.mxu0 0
    %341 = vmatprep.subr.bf16.mxu0 0
    %342 = vmatpush1.bf16.msra.mxu0 0
    %343 = vmatprep.subr.bf16.mxu0 0
    %344 = vmatpush1.bf16.msra.mxu0 0
    %345 = vmatprep.subr.bf16.mxu0 0
    %346 = vmatpush1.bf16.msra.mxu0 0
    %347 = vmatprep.subr.bf16.mxu0 0
    %348 = vmatpush1.bf16.msra.mxu0 0
    %349 = vmatprep.subr.bf16.mxu0 0
    %350 = vmatpush1.bf16.msra.mxu0 0
    %351 = vmatprep.subr.bf16.mxu0 0
    %352 = vmatpush1.bf16.msra.mxu0 0
    %353 = vmatprep.subr.bf16.mxu0 0
    %354 = vmatpush1.bf16.msra.mxu0 0
    %355 = vmatprep.subr.bf16.mxu0 0
    %356 = vmatpush1.bf16.msra.mxu0 0
    %357 = vmatprep.subr.bf16.mxu0 0
    %358 = vmatpush1.bf16.msra.mxu0 0
    %359 = vmatprep.subr.bf16.mxu0 0
    %360 = vmatpush1.bf16.msra.mxu0 0
    %361 = vmatprep.subr.bf16.mxu0 0
    %362 = vmatpush1.bf16.msra.mxu0 0
    %363 = vmatprep.subr.bf16.mxu0 0
    %364 = vmatpush1.bf16.msra.mxu0 0
    %365 = vmatprep.mubr.bf16.mxu0 0
    %366 = vmatmul.mubr.bf16.gmra.mrb[0].mxu0 %v267
    %v367 = vpop.f32.mrb[0].mxu0
    %v368 = vadd.f32 %v319, %v367
    %v369 = vpop.f32.mrb[0].mxu0
    %v370 = vpop.f32.mrb[0].mxu0
    %v371 = vadd.f32 %v319, %v370
    %v372 = vpop.f32.mrb[0].mxu0
    %373 = vdwg.mxu0
    %v374 = vpack.c.bf16 %v240, %v237
    %v376 = vunpack.c.l.b16 %v374
    %v377 = vunpack.c.h.b16 %v374
    %v378 = vpack.c.b16 %v376, %v376
    %v379 = vpack.c.b16 %v377, %v377
    %v380 = vpack.c.bf16 %v307, %v304
    %v382 = vunpack.c.l.b16 %v380
    %v383 = vunpack.c.h.b16 %v380
    %v384 = vpack.c.b16 %v382, %v382
    %v385 = vpack.c.b16 %v383, %v383
    %v386 = vpack.c.bf16 %v371, %v368
    %v388 = vunpack.c.l.b16 %v386
    %v389 = vunpack.c.h.b16 %v386
    %v390 = vpack.c.b16 %v388, %v388
    %v391 = vpack.c.b16 %v389, %v389
    %vm392 = vcmask 64512
    %v394 = vsel %vm392, %v378, 0
    %v397 = vsel %vm392, %v384, 0
    %399 = vmatprep.subr.bf16.mxu0 0
    %400 = vmatpush1.bf16.xpose.msra.mxu0 %v397
    %401 = vmatprep.subr.bf16.mxu0 0
    %402 = vmatpush1.bf16.xpose.msra.mxu0 0
    %403 = vmatprep.subr.bf16.mxu0 0
    %404 = vmatpush1.bf16.xpose.msra.mxu0 0
    %405 = vmatprep.subr.bf16.mxu0 0
    %406 = vmatpush1.bf16.xpose.msra.mxu0 0
    %407 = vmatprep.subr.bf16.mxu0 0
    %408 = vmatpush1.bf16.xpose.msra.mxu0 0
    %409 = vmatprep.subr.bf16.mxu0 0
    %410 = vmatpush1.bf16.xpose.msra.mxu0 0
    %411 = vmatprep.subr.bf16.mxu0 0
    %412 = vmatpush1.bf16.xpose.msra.mxu0 0
    %413 = vmatprep.subr.bf16.mxu0 0
    %414 = vmatpush1.bf16.xpose.msra.mxu0 0
    %415 = vmatprep.subr.bf16.mxu0 0
    %416 = vmatpush1.bf16.xpose.msra.mxu0 0
    %417 = vmatprep.subr.bf16.mxu0 0
    %418 = vmatpush1.bf16.xpose.msra.mxu0 0
    %419 = vmatprep.subr.bf16.mxu0 0
    %420 = vmatpush1.bf16.xpose.msra.mxu0 0
    %421 = vmatprep.subr.bf16.mxu0 0
    %422 = vmatpush1.bf16.xpose.msra.mxu0 0
    %423 = vmatprep.subr.bf16.mxu0 0
    %424 = vmatpush1.bf16.xpose.msra.mxu0 0
    %425 = vmatprep.subr.bf16.mxu0 0
    %426 = vmatpush1.bf16.xpose.msra.mxu0 0
    %427 = vmatprep.subr.bf16.mxu0 0
    %428 = vmatpush1.bf16.xpose.msra.mxu0 0
    %429 = vmatprep.subr.bf16.mxu0 0
    %430 = vmatpush1.bf16.xpose.msra.mxu0 0
    %431 = vmatprep.mubr.bf16.mxu0 0
    %432 = vmatmul.mubr.bf16.gmra.mrb[0].mxu0 %v394
    %v433 = vpop.f32.mrb[0].mxu0
    %v434 = vadd.f32 0.0, %v433
    %v435 = vpop.f32.mrb[0].mxu0
    %v436 = vpop.f32.mrb[0].mxu0
    %v437 = vpop.f32.mrb[0].mxu0
    %438 = vdwg.mxu0
    %v440 = vsel %vm392, %v379, 0
    %v443 = vsel %vm392, %v385, 0
    %445 = vmatprep.subr.bf16.mxu0 0
    %446 = vmatpush1.bf16.xpose.msra.mxu0 %v443
    %447 = vmatprep.subr.bf16.mxu0 0
    %448 = vmatpush1.bf16.xpose.msra.mxu0 0
    %449 = vmatprep.subr.bf16.mxu0 0
    %450 = vmatpush1.bf16.xpose.msra.mxu0 0
    %451 = vmatprep.subr.bf16.mxu0 0
    %452 = vmatpush1.bf16.xpose.msra.mxu0 0
    %453 = vmatprep.subr.bf16.mxu0 0
    %454 = vmatpush1.bf16.xpose.msra.mxu0 0
    %455 = vmatprep.subr.bf16.mxu0 0
    %456 = vmatpush1.bf16.xpose.msra.mxu0 0
    %457 = vmatprep.subr.bf16.mxu0 0
    %458 = vmatpush1.bf16.xpose.msra.mxu0 0
    %459 = vmatprep.subr.bf16.mxu0 0
    %460 = vmatpush1.bf16.xpose.msra.mxu0 0
    %461 = vmatprep.subr.bf16.mxu0 0
    %462 = vmatpush1.bf16.xpose.msra.mxu0 0
    %463 = vmatprep.subr.bf16.mxu0 0
    %464 = vmatpush1.bf16.xpose.msra.mxu0 0
    %465 = vmatprep.subr.bf16.mxu0 0
    %466 = vmatpush1.bf16.xpose.msra.mxu0 0
    %467 = vmatprep.subr.bf16.mxu0 0
    %468 = vmatpush1.bf16.xpose.msra.mxu0 0
    %469 = vmatprep.subr.bf16.mxu0 0
    %470 = vmatpush1.bf16.xpose.msra.mxu0 0
    %471 = vmatprep.subr.bf16.mxu0 0
    %472 = vmatpush1.bf16.xpose.msra.mxu0 0
    %473 = vmatprep.subr.bf16.mxu0 0
    %474 = vmatpush1.bf16.xpose.msra.mxu0 0
    %475 = vmatprep.subr.bf16.mxu0 0
    %476 = vmatpush1.bf16.xpose.msra.mxu0 0
    %477 = vmatprep.mubr.bf16.mxu0 0
    %478 = vmatmul.mubr.bf16.gmra.mrb[0].mxu0 %v440
    %v479 = vpop.f32.mrb[0].mxu0
    %v480 = vadd.f32 0.0, %v479
    %v481 = vpop.f32.mrb[0].mxu0
    %v482 = vpop.f32.mrb[0].mxu0
    %v483 = vpop.f32.mrb[0].mxu0
    %484 = vdwg.mxu0
    %v485 = vsel %vm392, %v434, -inf
    %486 = vmax.xlane.f32.xlu0 %v485
    %v487 = vpop.xlane.xlu0 %486
    %v488 = vsel %vm392, %v480, -inf
    %489 = vmax.xlane.f32.xlu0 %v488
    %v490 = vpop.xlane.xlu0 %489
    %v491 = vsub.f32 %v434, %v487
    %v492 = vsub.f32 %v480, %v490
    %v493 = vmul.f32 %v491, 1.442695
    %v494 = vpow.pop %v493
    %v495 = vmul.f32 %v492, 1.442695
    %v496 = vpow.pop %v495
    %v497 = vsel %vm392, %v494, 0.0
    %498 = vadd.xlane.f32.xlu0 %v497
    %v499 = vpop.xlane.xlu0 %498
    %v500 = vsel %vm392, %v496, 0.0
    %501 = vadd.xlane.f32.xlu0 %v500
    %v502 = vpop.xlane.xlu0 %501
    %v503 = vrcp.pop %v499
    %v504 = vrcp.pop %v502
    %v505 = vmul.f32 %v494, %v503
    %v506 = vmul.f32 %v496, %v504
    %v507 = vpack.c.bf16 %v505, %v505
    %v508 = vpack.c.bf16 %v506, %v506
    %v510 = vsel %vm392, %v507, 0
    %vm512 = vcmask 1043456
    %v514 = vsel %vm512, %v390, 0
    %516 = vmatprep.subr.bf16.mxu0 0
    %517 = vmatpush1.bf16.msra.mxu0 %v514
    %518 = vmatprep.subr.bf16.mxu0 0
    %519 = vmatpush1.bf16.msra.mxu0 0
    %520 = vmatprep.subr.bf16.mxu0 0
    %521 = vmatpush1.bf16.msra.mxu0 0
    %522 = vmatprep.subr.bf16.mxu0 0
    %523 = vmatpush1.bf16.msra.mxu0 0
    %524 = vmatprep.subr.bf16.mxu0 0
    %525 = vmatpush1.bf16.msra.mxu0 0
    %526 = vmatprep.subr.bf16.mxu0 0
    %527 = vmatpush1.bf16.msra.mxu0 0
    %528 = vmatprep.subr.bf16.mxu0 0
    %529 = vmatpush1.bf16.msra.mxu0 0
    %530 = vmatprep.subr.bf16.mxu0 0
    %531 = vmatpush1.bf16.msra.mxu0 0
    %532 = vmatprep.subr.bf16.mxu0 0
    %533 = vmatpush1.bf16.msra.mxu0 0
    %534 = vmatprep.subr.bf16.mxu0 0
    %535 = vmatpush1.bf16.msra.mxu0 0
    %536 = vmatprep.subr.bf16.mxu0 0
    %537 = vmatpush1.bf16.msra.mxu0 0
    %538 = vmatprep.subr.bf16.mxu0 0
    %539 = vmatpush1.bf16.msra.mxu0 0
    %540 = vmatprep.subr.bf16.mxu0 0
    %541 = vmatpush1.bf16.msra.mxu0 0
    %542 = vmatprep.subr.bf16.mxu0 0
    %543 = vmatpush1.bf16.msra.mxu0 0
    %544 = vmatprep.subr.bf16.mxu0 0
    %545 = vmatpush1.bf16.msra.mxu0 0
    %546 = vmatprep.subr.bf16.mxu0 0
    %547 = vmatpush1.bf16.msra.mxu0 0
    %548 = vmatprep.mubr.bf16.mxu0 0
    %549 = vmatmul.mubr.bf16.gmra.mrb[0].mxu0 %v510
    %v550 = vpop.f32.mrb[0].mxu0
    %v551 = vadd.f32 0.0, %v550
    %v552 = vpop.f32.mrb[0].mxu0
    %v553 = vpop.f32.mrb[0].mxu0
    %v554 = vpop.f32.mrb[0].mxu0
    %555 = vdwg.mxu0
    %v557 = vsel %vm392, %v508, 0
    %v560 = vsel %vm512, %v391, 0
    %562 = vmatprep.subr.bf16.mxu0 0
    %563 = vmatpush1.bf16.msra.mxu0 %v560
    %564 = vmatprep.subr.bf16.mxu0 0
    %565 = vmatpush1.bf16.msra.mxu0 0
    %566 = vmatprep.subr.bf16.mxu0 0
    %567 = vmatpush1.bf16.msra.mxu0 0
    %568 = vmatprep.subr.bf16.mxu0 0
    %569 = vmatpush1.bf16.msra.mxu0 0
    %570 = vmatprep.subr.bf16.mxu0 0
    %571 = vmatpush1.bf16.msra.mxu0 0
    %572 = vmatprep.subr.bf16.mxu0 0
    %573 = vmatpush1.bf16.msra.mxu0 0
    %574 = vmatprep.subr.bf16.mxu0 0
    %575 = vmatpush1.bf16.msra.mxu0 0
    %576 = vmatprep.subr.bf16.mxu0 0
    %577 = vmatpush1.bf16.msra.mxu0 0
    %578 = vmatprep.subr.bf16.mxu0 0
    %579 = vmatpush1.bf16.msra.mxu0 0
    %580 = vmatprep.subr.bf16.mxu0 0
    %581 = vmatpush1.bf16.msra.mxu0 0
    %582 = vmatprep.subr.bf16.mxu0 0
    %583 = vmatpush1.bf16.msra.mxu0 0
    %584 = vmatprep.subr.bf16.mxu0 0
    %585 = vmatpush1.bf16.msra.mxu0 0
    %586 = vmatprep.subr.bf16.mxu0 0
    %587 = vmatpush1.bf16.msra.mxu0 0
    %588 = vmatprep.subr.bf16.mxu0 0
    %589 = vmatpush1.bf16.msra.mxu0 0
    %590 = vmatprep.subr.bf16.mxu0 0
    %591 = vmatpush1.bf16.msra.mxu0 0
    %592 = vmatprep.subr.bf16.mxu0 0
    %593 = vmatpush1.bf16.msra.mxu0 0
    %594 = vmatprep.mubr.bf16.mxu0 0
    %595 = vmatmul.mubr.bf16.gmra.mrb[0].mxu0 %v557
    %v596 = vpop.f32.mrb[0].mxu0
    %v597 = vadd.f32 0.0, %v596
    %v598 = vpop.f32.mrb[0].mxu0
    %v599 = vpop.f32.mrb[0].mxu0
    %v600 = vpop.f32.mrb[0].mxu0
    %601 = vdwg.mxu0
    %602 = vrot.lane.b32.xlu0 %v378, 120
    %v603 = vpop.permute.xlu0 %602
    %604 = vrot.lane.b32.xlu0 %v384, 120
    %v605 = vpop.permute.xlu0 %604
    %v607 = vsel %vm392, %v603, 0
    %v610 = vsel %vm392, %v605, 0
    %612 = vmatprep.subr.bf16.mxu0 0
    %613 = vmatpush1.bf16.xpose.msra.mxu0 %v610
    %614 = vmatprep.subr.bf16.mxu0 0
    %615 = vmatpush1.bf16.xpose.msra.mxu0 0
    %616 = vmatprep.subr.bf16.mxu0 0
    %617 = vmatpush1.bf16.xpose.msra.mxu0 0
    %618 = vmatprep.subr.bf16.mxu0 0
    %619 = vmatpush1.bf16.xpose.msra.mxu0 0
    %620 = vmatprep.subr.bf16.mxu0 0
    %621 = vmatpush1.bf16.xpose.msra.mxu0 0
    %622 = vmatprep.subr.bf16.mxu0 0
    %623 = vmatpush1.bf16.xpose.msra.mxu0 0
    %624 = vmatprep.subr.bf16.mxu0 0
    %625 = vmatpush1.bf16.xpose.msra.mxu0 0
    %626 = vmatprep.subr.bf16.mxu0 0
    %627 = vmatpush1.bf16.xpose.msra.mxu0 0
    %628 = vmatprep.subr.bf16.mxu0 0
    %629 = vmatpush1.bf16.xpose.msra.mxu0 0
    %630 = vmatprep.subr.bf16.mxu0 0
    %631 = vmatpush1.bf16.xpose.msra.mxu0 0
    %632 = vmatprep.subr.bf16.mxu0 0
    %633 = vmatpush1.bf16.xpose.msra.mxu0 0
    %634 = vmatprep.subr.bf16.mxu0 0
    %635 = vmatpush1.bf16.xpose.msra.mxu0 0
    %636 = vmatprep.subr.bf16.mxu0 0
    %637 = vmatpush1.bf16.xpose.msra.mxu0 0
    %638 = vmatprep.subr.bf16.mxu0 0
    %639 = vmatpush1.bf16.xpose.msra.mxu0 0
    %640 = vmatprep.subr.bf16.mxu0 0
    %641 = vmatpush1.bf16.xpose.msra.mxu0 0
    %642 = vmatprep.subr.bf16.mxu0 0
    %643 = vmatpush1.bf16.xpose.msra.mxu0 0
    %644 = vmatprep.mubr.bf16.mxu0 0
    %645 = vmatmul.mubr.bf16.gmra.mrb[0].mxu0 %v607
    %v646 = vpop.f32.mrb[0].mxu0
    %v647 = vadd.f32 0.0, %v646
    %v648 = vpop.f32.mrb[0].mxu0
    %v649 = vpop.f32.mrb[0].mxu0
    %v650 = vpop.f32.mrb[0].mxu0
    %651 = vdwg.mxu0
    %652 = vrot.lane.b32.xlu0 %v379, 120
    %v653 = vpop.permute.xlu0 %652
    %654 = vrot.lane.b32.xlu0 %v385, 120
    %v655 = vpop.permute.xlu0 %654
    %v657 = vsel %vm392, %v653, 0
    %v660 = vsel %vm392, %v655, 0
    %662 = vmatprep.subr.bf16.mxu0 0
    %663 = vmatpush1.bf16.xpose.msra.mxu0 %v660
    %664 = vmatprep.subr.bf16.mxu0 0
    %665 = vmatpush1.bf16.xpose.msra.mxu0 0
    %666 = vmatprep.subr.bf16.mxu0 0
    %667 = vmatpush1.bf16.xpose.msra.mxu0 0
    %668 = vmatprep.subr.bf16.mxu0 0
    %669 = vmatpush1.bf16.xpose.msra.mxu0 0
    %670 = vmatprep.subr.bf16.mxu0 0
    %671 = vmatpush1.bf16.xpose.msra.mxu0 0
    %672 = vmatprep.subr.bf16.mxu0 0
    %673 = vmatpush1.bf16.xpose.msra.mxu0 0
    %674 = vmatprep.subr.bf16.mxu0 0
    %675 = vmatpush1.bf16.xpose.msra.mxu0 0
    %676 = vmatprep.subr.bf16.mxu0 0
    %677 = vmatpush1.bf16.xpose.msra.mxu0 0
    %678 = vmatprep.subr.bf16.mxu0 0
    %679 = vmatpush1.bf16.xpose.msra.mxu0 0
    %680 = vmatprep.subr.bf16.mxu0 0
    %681 = vmatpush1.bf16.xpose.msra.mxu0 0
    %682 = vmatprep.subr.bf16.mxu0 0
    %683 = vmatpush1.bf16.xpose.msra.mxu0 0
    %684 = vmatprep.subr.bf16.mxu0 0
    %685 = vmatpush1.bf16.xpose.msra.mxu0 0
    %686 = vmatprep.subr.bf16.mxu0 0
    %687 = vmatpush1.bf16.xpose.msra.mxu0 0
    %688 = vmatprep.subr.bf16.mxu0 0
    %689 = vmatpush1.bf16.xpose.msra.mxu0 0
    %690 = vmatprep.subr.bf16.mxu0 0
    %691 = vmatpush1.bf16.xpose.msra.mxu0 0
    %692 = vmatprep.subr.bf16.mxu0 0
    %693 = vmatpush1.bf16.xpose.msra.mxu0 0
    %694 = vmatprep.mubr.bf16.mxu0 0
    %695 = vmatmul.mubr.bf16.gmra.mrb[0].mxu0 %v657
    %v696 = vpop.f32.mrb[0].mxu0
    %v697 = vadd.f32 0.0, %v696
    %v698 = vpop.f32.mrb[0].mxu0
    %v699 = vpop.f32.mrb[0].mxu0
    %v700 = vpop.f32.mrb[0].mxu0
    %701 = vdwg.mxu0
    %v702 = vsel %vm392, %v647, -inf
    %703 = vmax.xlane.f32.xlu0 %v702
    %v704 = vpop.xlane.xlu0 %703
    %v705 = vsel %vm392, %v697, -inf
    %706 = vmax.xlane.f32.xlu0 %v705
    %v707 = vpop.xlane.xlu0 %706
    %v708 = vsub.f32 %v647, %v704
    %v709 = vsub.f32 %v697, %v707
    %v710 = vmul.f32 %v708, 1.442695
    %v711 = vpow.pop %v710
    %v712 = vmul.f32 %v709, 1.442695
    %v713 = vpow.pop %v712
    %v714 = vsel %vm392, %v711, 0.0
    %715 = vadd.xlane.f32.xlu0 %v714
    %v716 = vpop.xlane.xlu0 %715
    %v717 = vsel %vm392, %v713, 0.0
    %718 = vadd.xlane.f32.xlu0 %v717
    %v719 = vpop.xlane.xlu0 %718
    %v720 = vrcp.pop %v716
    %v721 = vrcp.pop %v719
    %v722 = vmul.f32 %v711, %v720
    %v723 = vmul.f32 %v713, %v721
    %v724 = vpack.c.bf16 %v722, %v722
    %v725 = vpack.c.bf16 %v723, %v723
    %726 = vrot.lane.b32.xlu0 %v390, 120
    %v727 = vpop.permute.xlu0 %726
    %v729 = vsel %vm392, %v724, 0
    %v732 = vsel %vm512, %v727, 0
    %734 = vmatprep.subr.bf16.mxu0 0
    %735 = vmatpush1.bf16.msra.mxu0 %v732
    %736 = vmatprep.subr.bf16.mxu0 0
    %737 = vmatpush1.bf16.msra.mxu0 0
    %738 = vmatprep.subr.bf16.mxu0 0
    %739 = vmatpush1.bf16.msra.mxu0 0
    %740 = vmatprep.subr.bf16.mxu0 0
    %741 = vmatpush1.bf16.msra.mxu0 0
    %742 = vmatprep.subr.bf16.mxu0 0
    %743 = vmatpush1.bf16.msra.mxu0 0
    %744 = vmatprep.subr.bf16.mxu0 0
    %745 = vmatpush1.bf16.msra.mxu0 0
    %746 = vmatprep.subr.bf16.mxu0 0
    %747 = vmatpush1.bf16.msra.mxu0 0
    %748 = vmatprep.subr.bf16.mxu0 0
    %749 = vmatpush1.bf16.msra.mxu0 0
    %750 = vmatprep.subr.bf16.mxu0 0
    %751 = vmatpush1.bf16.msra.mxu0 0
    %752 = vmatprep.subr.bf16.mxu0 0
    %753 = vmatpush1.bf16.msra.mxu0 0
    %754 = vmatprep.subr.bf16.mxu0 0
    %755 = vmatpush1.bf16.msra.mxu0 0
    %756 = vmatprep.subr.bf16.mxu0 0
    %757 = vmatpush1.bf16.msra.mxu0 0
    %758 = vmatprep.subr.bf16.mxu0 0
    %759 = vmatpush1.bf16.msra.mxu0 0
    %760 = vmatprep.subr.bf16.mxu0 0
    %761 = vmatpush1.bf16.msra.mxu0 0
    %762 = vmatprep.subr.bf16.mxu0 0
    %763 = vmatpush1.bf16.msra.mxu0 0
    %764 = vmatprep.subr.bf16.mxu0 0
    %765 = vmatpush1.bf16.msra.mxu0 0
    %766 = vmatprep.mubr.bf16.mxu0 0
    %767 = vmatmul.mubr.bf16.gmra.mrb[0].mxu0 %v729
    %v768 = vpop.f32.mrb[0].mxu0
    %v769 = vadd.f32 0.0, %v768
    %v770 = vpop.f32.mrb[0].mxu0
    %v771 = vpop.f32.mrb[0].mxu0
    %v772 = vpop.f32.mrb[0].mxu0
    %773 = vdwg.mxu0
    %774 = vrot.lane.b32.xlu0 %v391, 120
    %v775 = vpop.permute.xlu0 %774
    %v777 = vsel %vm392, %v725, 0
    %v780 = vsel %vm512, %v775, 0
    %782 = vmatprep.subr.bf16.mxu0 0
    %783 = vmatpush1.bf16.msra.mxu0 %v780
    %784 = vmatprep.subr.bf16.mxu0 0
    %785 = vmatpush1.bf16.msra.mxu0 0
    %786 = vmatprep.subr.bf16.mxu0 0
    %787 = vmatpush1.bf16.msra.mxu0 0
    %788 = vmatprep.subr.bf16.mxu0 0
    %789 = vmatpush1.bf16.msra.mxu0 0
    %790 = vmatprep.subr.bf16.mxu0 0
    %791 = vmatpush1.bf16.msra.mxu0 0
    %792 = vmatprep.subr.bf16.mxu0 0
    %793 = vmatpush1.bf16.msra.mxu0 0
    %794 = vmatprep.subr.bf16.mxu0 0
    %795 = vmatpush1.bf16.msra.mxu0 0
    %796 = vmatprep.subr.bf16.mxu0 0
    %797 = vmatpush1.bf16.msra.mxu0 0
    %798 = vmatprep.subr.bf16.mxu0 0
    %799 = vmatpush1.bf16.msra.mxu0 0
    %800 = vmatprep.subr.bf16.mxu0 0
    %801 = vmatpush1.bf16.msra.mxu0 0
    %802 = vmatprep.subr.bf16.mxu0 0
    %803 = vmatpush1.bf16.msra.mxu0 0
    %804 = vmatprep.subr.bf16.mxu0 0
    %805 = vmatpush1.bf16.msra.mxu0 0
    %806 = vmatprep.subr.bf16.mxu0 0
    %807 = vmatpush1.bf16.msra.mxu0 0
    %808 = vmatprep.subr.bf16.mxu0 0
    %809 = vmatpush1.bf16.msra.mxu0 0
    %810 = vmatprep.subr.bf16.mxu0 0
    %811 = vmatpush1.bf16.msra.mxu0 0
    %812 = vmatprep.subr.bf16.mxu0 0
    %813 = vmatpush1.bf16.msra.mxu0 0
    %814 = vmatprep.mubr.bf16.mxu0 0
    %815 = vmatmul.mubr.bf16.gmra.mrb[0].mxu0 %v777
    %v816 = vpop.f32.mrb[0].mxu0
    %v817 = vadd.f32 0.0, %v816
    %v818 = vpop.f32.mrb[0].mxu0
    %v819 = vpop.f32.mrb[0].mxu0
    %v820 = vpop.f32.mrb[0].mxu0
    %821 = vdwg.mxu0
    %822 = vrot.lane.b32.xlu0 %v378, 112
    %v823 = vpop.permute.xlu0 %822
    %824 = vrot.lane.b32.xlu0 %v384, 112
    %v825 = vpop.permute.xlu0 %824
    %v827 = vsel %vm392, %v823, 0
    %v830 = vsel %vm392, %v825, 0
    %832 = vmatprep.subr.bf16.mxu0 0
    %833 = vmatpush1.bf16.xpose.msra.mxu0 %v830
    %834 = vmatprep.subr.bf16.mxu0 0
    %835 = vmatpush1.bf16.xpose.msra.mxu0 0
    %836 = vmatprep.subr.bf16.mxu0 0
    %837 = vmatpush1.bf16.xpose.msra.mxu0 0
    %838 = vmatprep.subr.bf16.mxu0 0
    %839 = vmatpush1.bf16.xpose.msra.mxu0 0
    %840 = vmatprep.subr.bf16.mxu0 0
    %841 = vmatpush1.bf16.xpose.msra.mxu0 0
    %842 = vmatprep.subr.bf16.mxu0 0
    %843 = vmatpush1.bf16.xpose.msra.mxu0 0
    %844 = vmatprep.subr.bf16.mxu0 0
    %845 = vmatpush1.bf16.xpose.msra.mxu0 0
    %846 = vmatprep.subr.bf16.mxu0 0
    %847 = vmatpush1.bf16.xpose.msra.mxu0 0
    %848 = vmatprep.subr.bf16.mxu0 0
    %849 = vmatpush1.bf16.xpose.msra.mxu0 0
    %850 = vmatprep.subr.bf16.mxu0 0
    %851 = vmatpush1.bf16.xpose.msra.mxu0 0
    %852 = vmatprep.subr.bf16.mxu0 0
    %853 = vmatpush1.bf16.xpose.msra.mxu0 0
    %854 = vmatprep.subr.bf16.mxu0 0
    %855 = vmatpush1.bf16.xpose.msra.mxu0 0
    %856 = vmatprep.subr.bf16.mxu0 0
    %857 = vmatpush1.bf16.xpose.msra.mxu0 0
    %858 = vmatprep.subr.bf16.mxu0 0
    %859 = vmatpush1.bf16.xpose.msra.mxu0 0
    %860 = vmatprep.subr.bf16.mxu0 0
    %861 = vmatpush1.bf16.xpose.msra.mxu0 0
    %862 = vmatprep.subr.bf16.mxu0 0
    %863 = vmatpush1.bf16.xpose.msra.mxu0 0
    %864 = vmatprep.mubr.bf16.mxu0 0
    %865 = vmatmul.mubr.bf16.gmra.mrb[0].mxu0 %v827
    %v866 = vpop.f32.mrb[0].mxu0
    %v867 = vadd.f32 0.0, %v866
    %v868 = vpop.f32.mrb[0].mxu0
    %v869 = vpop.f32.mrb[0].mxu0
    %v870 = vpop.f32.mrb[0].mxu0
    %871 = vdwg.mxu0
    %872 = vrot.lane.b32.xlu0 %v379, 112
    %v873 = vpop.permute.xlu0 %872
    %874 = vrot.lane.b32.xlu0 %v385, 112
    %v875 = vpop.permute.xlu0 %874
    %v877 = vsel %vm392, %v873, 0
    %v880 = vsel %vm392, %v875, 0
    %882 = vmatprep.subr.bf16.mxu0 0
    %883 = vmatpush1.bf16.xpose.msra.mxu0 %v880
    %884 = vmatprep.subr.bf16.mxu0 0
    %885 = vmatpush1.bf16.xpose.msra.mxu0 0
    %886 = vmatprep.subr.bf16.mxu0 0
    %887 = vmatpush1.bf16.xpose.msra.mxu0 0
    %888 = vmatprep.subr.bf16.mxu0 0
    %889 = vmatpush1.bf16.xpose.msra.mxu0 0
    %890 = vmatprep.subr.bf16.mxu0 0
    %891 = vmatpush1.bf16.xpose.msra.mxu0 0
    %892 = vmatprep.subr.bf16.mxu0 0
    %893 = vmatpush1.bf16.xpose.msra.mxu0 0
    %894 = vmatprep.subr.bf16.mxu0 0
    %895 = vmatpush1.bf16.xpose.msra.mxu0 0
    %896 = vmatprep.subr.bf16.mxu0 0
    %897 = vmatpush1.bf16.xpose.msra.mxu0 0
    %898 = vmatprep.subr.bf16.mxu0 0
    %899 = vmatpush1.bf16.xpose.msra.mxu0 0
    %900 = vmatprep.subr.bf16.mxu0 0
    %901 = vmatpush1.bf16.xpose.msra.mxu0 0
    %902 = vmatprep.subr.bf16.mxu0 0
    %903 = vmatpush1.bf16.xpose.msra.mxu0 0
    %904 = vmatprep.subr.bf16.mxu0 0
    %905 = vmatpush1.bf16.xpose.msra.mxu0 0
    %906 = vmatprep.subr.bf16.mxu0 0
    %907 = vmatpush1.bf16.xpose.msra.mxu0 0
    %908 = vmatprep.subr.bf16.mxu0 0
    %909 = vmatpush1.bf16.xpose.msra.mxu0 0
    %910 = vmatprep.subr.bf16.mxu0 0
    %911 = vmatpush1.bf16.xpose.msra.mxu0 0
    %912 = vmatprep.subr.bf16.mxu0 0
    %913 = vmatpush1.bf16.xpose.msra.mxu0 0
    %914 = vmatprep.mubr.bf16.mxu0 0
    %915 = vmatmul.mubr.bf16.gmra.mrb[0].mxu0 %v877
    %v916 = vpop.f32.mrb[0].mxu0
    %v917 = vadd.f32 0.0, %v916
    %v918 = vpop.f32.mrb[0].mxu0
    %v919 = vpop.f32.mrb[0].mxu0
    %v920 = vpop.f32.mrb[0].mxu0
    %921 = vdwg.mxu0
    %v922 = vsel %vm392, %v867, -inf
    %923 = vmax.xlane.f32.xlu0 %v922
    %v924 = vpop.xlane.xlu0 %923
    %v925 = vsel %vm392, %v917, -inf
    %926 = vmax.xlane.f32.xlu0 %v925
    %v927 = vpop.xlane.xlu0 %926
    %v928 = vsub.f32 %v867, %v924
    %v929 = vsub.f32 %v917, %v927
    %v930 = vmul.f32 %v928, 1.442695
    %v931 = vpow.pop %v930
    %v932 = vmul.f32 %v929, 1.442695
    %v933 = vpow.pop %v932
    %v934 = vsel %vm392, %v931, 0.0
    %935 = vadd.xlane.f32.xlu0 %v934
    %v936 = vpop.xlane.xlu0 %935
    %v937 = vsel %vm392, %v933, 0.0
    %938 = vadd.xlane.f32.xlu0 %v937
    %v939 = vpop.xlane.xlu0 %938
    %v940 = vrcp.pop %v936
    %v941 = vrcp.pop %v939
    %v942 = vmul.f32 %v931, %v940
    %v943 = vmul.f32 %v933, %v941
    %v944 = vpack.c.bf16 %v942, %v942
    %v945 = vpack.c.bf16 %v943, %v943
    %946 = vrot.lane.b32.xlu0 %v390, 112
    %v947 = vpop.permute.xlu0 %946
    %v949 = vsel %vm392, %v944, 0
    %v952 = vsel %vm512, %v947, 0
    %954 = vmatprep.subr.bf16.mxu0 0
    %955 = vmatpush1.bf16.msra.mxu0 %v952
    %956 = vmatprep.subr.bf16.mxu0 0
    %957 = vmatpush1.bf16.msra.mxu0 0
    %958 = vmatprep.subr.bf16.mxu0 0
    %959 = vmatpush1.bf16.msra.mxu0 0
    %960 = vmatprep.subr.bf16.mxu0 0
    %961 = vmatpush1.bf16.msra.mxu0 0
    %962 = vmatprep.subr.bf16.mxu0 0
    %963 = vmatpush1.bf16.msra.mxu0 0
    %964 = vmatprep.subr.bf16.mxu0 0
    %965 = vmatpush1.bf16.msra.mxu0 0
    %966 = vmatprep.subr.bf16.mxu0 0
    %967 = vmatpush1.bf16.msra.mxu0 0
    %968 = vmatprep.subr.bf16.mxu0 0
    %969 = vmatpush1.bf16.msra.mxu0 0
    %970 = vmatprep.subr.bf16.mxu0 0
    %971 = vmatpush1.bf16.msra.mxu0 0
    %972 = vmatprep.subr.bf16.mxu0 0
    %973 = vmatpush1.bf16.msra.mxu0 0
    %974 = vmatprep.subr.bf16.mxu0 0
    %975 = vmatpush1.bf16.msra.mxu0 0
    %976 = vmatprep.subr.bf16.mxu0 0
    %977 = vmatpush1.bf16.msra.mxu0 0
    %978 = vmatprep.subr.bf16.mxu0 0
    %979 = vmatpush1.bf16.msra.mxu0 0
    %980 = vmatprep.subr.bf16.mxu0 0
    %981 = vmatpush1.bf16.msra.mxu0 0
    %982 = vmatprep.subr.bf16.mxu0 0
    %983 = vmatpush1.bf16.msra.mxu0 0
    %984 = vmatprep.subr.bf16.mxu0 0
    %985 = vmatpush1.bf16.msra.mxu0 0
    %986 = vmatprep.mubr.bf16.mxu0 0
    %987 = vmatmul.mubr.bf16.gmra.mrb[0].mxu0 %v949
    %v988 = vpop.f32.mrb[0].mxu0
    %v989 = vadd.f32 0.0, %v988
    %v990 = vpop.f32.mrb[0].mxu0
    %v991 = vpop.f32.mrb[0].mxu0
    %v992 = vpop.f32.mrb[0].mxu0
    %993 = vdwg.mxu0
    %994 = vrot.lane.b32.xlu0 %v391, 112
    %v995 = vpop.permute.xlu0 %994
    %v997 = vsel %vm392, %v945, 0
    %v1000 = vsel %vm512, %v995, 0
    %1002 = vmatprep.subr.bf16.mxu0 0
    %1003 = vmatpush1.bf16.msra.mxu0 %v1000
    %1004 = vmatprep.subr.bf16.mxu0 0
    %1005 = vmatpush1.bf16.msra.mxu0 0
    %1006 = vmatprep.subr.bf16.mxu0 0
    %1007 = vmatpush1.bf16.msra.mxu0 0
    %1008 = vmatprep.subr.bf16.mxu0 0
    %1009 = vmatpush1.bf16.msra.mxu0 0
    %1010 = vmatprep.subr.bf16.mxu0 0
    %1011 = vmatpush1.bf16.msra.mxu0 0
    %1012 = vmatprep.subr.bf16.mxu0 0
    %1013 = vmatpush1.bf16.msra.mxu0 0
    %1014 = vmatprep.subr.bf16.mxu0 0
    %1015 = vmatpush1.bf16.msra.mxu0 0
    %1016 = vmatprep.subr.bf16.mxu0 0
    %1017 = vmatpush1.bf16.msra.mxu0 0
    %1018 = vmatprep.subr.bf16.mxu0 0
    %1019 = vmatpush1.bf16.msra.mxu0 0
    %1020 = vmatprep.subr.bf16.mxu0 0
    %1021 = vmatpush1.bf16.msra.mxu0 0
    %1022 = vmatprep.subr.bf16.mxu0 0
    %1023 = vmatpush1.bf16.msra.mxu0 0
    %1024 = vmatprep.subr.bf16.mxu0 0
    %1025 = vmatpush1.bf16.msra.mxu0 0
    %1026 = vmatprep.subr.bf16.mxu0 0
    %1027 = vmatpush1.bf16.msra.mxu0 0
    %1028 = vmatprep.subr.bf16.mxu0 0
    %1029 = vmatpush1.bf16.msra.mxu0 0
    %1030 = vmatprep.subr.bf16.mxu0 0
    %1031 = vmatpush1.bf16.msra.mxu0 0
    %1032 = vmatprep.subr.bf16.mxu0 0
    %1033 = vmatpush1.bf16.msra.mxu0 0
    %1034 = vmatprep.mubr.bf16.mxu0 0
    %1035 = vmatmul.mubr.bf16.gmra.mrb[0].mxu0 %v997
    %v1036 = vpop.f32.mrb[0].mxu0
    %v1037 = vadd.f32 0.0, %v1036
    %v1038 = vpop.f32.mrb[0].mxu0
    %v1039 = vpop.f32.mrb[0].mxu0
    %v1040 = vpop.f32.mrb[0].mxu0
    %1041 = vdwg.mxu0
    %1042 = vrot.lane.b32.xlu0 %v378, 104
    %v1043 = vpop.permute.xlu0 %1042
    %1044 = vrot.lane.b32.xlu0 %v384, 104
    %v1045 = vpop.permute.xlu0 %1044
    %v1047 = vsel %vm392, %v1043, 0
    %v1050 = vsel %vm392, %v1045, 0
    %1052 = vmatprep.subr.bf16.mxu0 0
    %1053 = vmatpush1.bf16.xpose.msra.mxu0 %v1050
    %1054 = vmatprep.subr.bf16.mxu0 0
    %1055 = vmatpush1.bf16.xpose.msra.mxu0 0
    %1056 = vmatprep.subr.bf16.mxu0 0
    %1057 = vmatpush1.bf16.xpose.msra.mxu0 0
    %1058 = vmatprep.subr.bf16.mxu0 0
    %1059 = vmatpush1.bf16.xpose.msra.mxu0 0
    %1060 = vmatprep.subr.bf16.mxu0 0
    %1061 = vmatpush1.bf16.xpose.msra.mxu0 0
    %1062 = vmatprep.subr.bf16.mxu0 0
    %1063 = vmatpush1.bf16.xpose.msra.mxu0 0
    %1064 = vmatprep.subr.bf16.mxu0 0
    %1065 = vmatpush1.bf16.xpose.msra.mxu0 0
    %1066 = vmatprep.subr.bf16.mxu0 0
    %1067 = vmatpush1.bf16.xpose.msra.mxu0 0
    %1068 = vmatprep.subr.bf16.mxu0 0
    %1069 = vmatpush1.bf16.xpose.msra.mxu0 0
    %1070 = vmatprep.subr.bf16.mxu0 0
    %1071 = vmatpush1.bf16.xpose.msra.mxu0 0
    %1072 = vmatprep.subr.bf16.mxu0 0
    %1073 = vmatpush1.bf16.xpose.msra.mxu0 0
    %1074 = vmatprep.subr.bf16.mxu0 0
    %1075 = vmatpush1.bf16.xpose.msra.mxu0 0
    %1076 = vmatprep.subr.bf16.mxu0 0
    %1077 = vmatpush1.bf16.xpose.msra.mxu0 0
    %1078 = vmatprep.subr.bf16.mxu0 0
    %1079 = vmatpush1.bf16.xpose.msra.mxu0 0
    %1080 = vmatprep.subr.bf16.mxu0 0
    %1081 = vmatpush1.bf16.xpose.msra.mxu0 0
    %1082 = vmatprep.subr.bf16.mxu0 0
    %1083 = vmatpush1.bf16.xpose.msra.mxu0 0
    %1084 = vmatprep.mubr.bf16.mxu0 0
    %1085 = vmatmul.mubr.bf16.gmra.mrb[0].mxu0 %v1047
    %v1086 = vpop.f32.mrb[0].mxu0
    %v1087 = vadd.f32 0.0, %v1086
    %v1088 = vpop.f32.mrb[0].mxu0
    %v1089 = vpop.f32.mrb[0].mxu0
    %v1090 = vpop.f32.mrb[0].mxu0
    %1091 = vdwg.mxu0
    %1092 = vrot.lane.b32.xlu0 %v379, 104
    %v1093 = vpop.permute.xlu0 %1092
    %1094 = vrot.lane.b32.xlu0 %v385, 104
    %v1095 = vpop.permute.xlu0 %1094
    %v1097 = vsel %vm392, %v1093, 0
    %v1100 = vsel %vm392, %v1095, 0
    %1102 = vmatprep.subr.bf16.mxu0 0
    %1103 = vmatpush1.bf16.xpose.msra.mxu0 %v1100
    %1104 = vmatprep.subr.bf16.mxu0 0
    %1105 = vmatpush1.bf16.xpose.msra.mxu0 0
    %1106 = vmatprep.subr.bf16.mxu0 0
    %1107 = vmatpush1.bf16.xpose.msra.mxu0 0
    %1108 = vmatprep.subr.bf16.mxu0 0
    %1109 = vmatpush1.bf16.xpose.msra.mxu0 0
    %1110 = vmatprep.subr.bf16.mxu0 0
    %1111 = vmatpush1.bf16.xpose.msra.mxu0 0
    %1112 = vmatprep.subr.bf16.mxu0 0
    %1113 = vmatpush1.bf16.xpose.msra.mxu0 0
    %1114 = vmatprep.subr.bf16.mxu0 0
    %1115 = vmatpush1.bf16.xpose.msra.mxu0 0
    %1116 = vmatprep.subr.bf16.mxu0 0
    %1117 = vmatpush1.bf16.xpose.msra.mxu0 0
    %1118 = vmatprep.subr.bf16.mxu0 0
    %1119 = vmatpush1.bf16.xpose.msra.mxu0 0
    %1120 = vmatprep.subr.bf16.mxu0 0
    %1121 = vmatpush1.bf16.xpose.msra.mxu0 0
    %1122 = vmatprep.subr.bf16.mxu0 0
    %1123 = vmatpush1.bf16.xpose.msra.mxu0 0
    %1124 = vmatprep.subr.bf16.mxu0 0
    %1125 = vmatpush1.bf16.xpose.msra.mxu0 0
    %1126 = vmatprep.subr.bf16.mxu0 0
    %1127 = vmatpush1.bf16.xpose.msra.mxu0 0
    %1128 = vmatprep.subr.bf16.mxu0 0
    %1129 = vmatpush1.bf16.xpose.msra.mxu0 0
    %1130 = vmatprep.subr.bf16.mxu0 0
    %1131 = vmatpush1.bf16.xpose.msra.mxu0 0
    %1132 = vmatprep.subr.bf16.mxu0 0
    %1133 = vmatpush1.bf16.xpose.msra.mxu0 0
    %1134 = vmatprep.mubr.bf16.mxu0 0
    %1135 = vmatmul.mubr.bf16.gmra.mrb[0].mxu0 %v1097
    %v1136 = vpop.f32.mrb[0].mxu0
    %v1137 = vadd.f32 0.0, %v1136
    %v1138 = vpop.f32.mrb[0].mxu0
    %v1139 = vpop.f32.mrb[0].mxu0
    %v1140 = vpop.f32.mrb[0].mxu0
    %1141 = vdwg.mxu0
    %v1142 = vsel %vm392, %v1087, -inf
    %1143 = vmax.xlane.f32.xlu0 %v1142
    %v1144 = vpop.xlane.xlu0 %1143
    %v1145 = vsel %vm392, %v1137, -inf
    %1146 = vmax.xlane.f32.xlu0 %v1145
    %v1147 = vpop.xlane.xlu0 %1146
    %v1148 = vsub.f32 %v1087, %v1144
    %v1149 = vsub.f32 %v1137, %v1147
    %v1150 = vmul.f32 %v1148, 1.442695
    %v1151 = vpow.pop %v1150
    %v1152 = vmul.f32 %v1149, 1.442695
    %v1153 = vpow.pop %v1152
    %v1154 = vsel %vm392, %v1151, 0.0
    %1155 = vadd.xlane.f32.xlu0 %v1154
    %v1156 = vpop.xlane.xlu0 %1155
    %v1157 = vsel %vm392, %v1153, 0.0
    %1158 = vadd.xlane.f32.xlu0 %v1157
    %v1159 = vpop.xlane.xlu0 %1158
    %v1160 = vrcp.pop %v1156
    %v1161 = vrcp.pop %v1159
    %v1162 = vmul.f32 %v1151, %v1160
    %v1163 = vmul.f32 %v1153, %v1161
    %v1164 = vpack.c.bf16 %v1162, %v1162
    %v1165 = vpack.c.bf16 %v1163, %v1163
    %1166 = vrot.lane.b32.xlu0 %v390, 104
    %v1167 = vpop.permute.xlu0 %1166
    %v1169 = vsel %vm392, %v1164, 0
    %v1172 = vsel %vm512, %v1167, 0
    %1174 = vmatprep.subr.bf16.mxu0 0
    %1175 = vmatpush1.bf16.msra.mxu0 %v1172
    %1176 = vmatprep.subr.bf16.mxu0 0
    %1177 = vmatpush1.bf16.msra.mxu0 0
    %1178 = vmatprep.subr.bf16.mxu0 0
    %1179 = vmatpush1.bf16.msra.mxu0 0
    %1180 = vmatprep.subr.bf16.mxu0 0
    %1181 = vmatpush1.bf16.msra.mxu0 0
    %1182 = vmatprep.subr.bf16.mxu0 0
    %1183 = vmatpush1.bf16.msra.mxu0 0
    %1184 = vmatprep.subr.bf16.mxu0 0
    %1185 = vmatpush1.bf16.msra.mxu0 0
    %1186 = vmatprep.subr.bf16.mxu0 0
    %1187 = vmatpush1.bf16.msra.mxu0 0
    %1188 = vmatprep.subr.bf16.mxu0 0
    %1189 = vmatpush1.bf16.msra.mxu0 0
    %1190 = vmatprep.subr.bf16.mxu0 0
    %1191 = vmatpush1.bf16.msra.mxu0 0
    %1192 = vmatprep.subr.bf16.mxu0 0
    %1193 = vmatpush1.bf16.msra.mxu0 0
    %1194 = vmatprep.subr.bf16.mxu0 0
    %1195 = vmatpush1.bf16.msra.mxu0 0
    %1196 = vmatprep.subr.bf16.mxu0 0
    %1197 = vmatpush1.bf16.msra.mxu0 0
    %1198 = vmatprep.subr.bf16.mxu0 0
    %1199 = vmatpush1.bf16.msra.mxu0 0
    %1200 = vmatprep.subr.bf16.mxu0 0
    %1201 = vmatpush1.bf16.msra.mxu0 0
    %1202 = vmatprep.subr.bf16.mxu0 0
    %1203 = vmatpush1.bf16.msra.mxu0 0
    %1204 = vmatprep.subr.bf16.mxu0 0
    %1205 = vmatpush1.bf16.msra.mxu0 0
    %1206 = vmatprep.mubr.bf16.mxu0 0
    %1207 = vmatmul.mubr.bf16.gmra.mrb[0].mxu0 %v1169
    %v1208 = vpop.f32.mrb[0].mxu0
    %v1209 = vadd.f32 0.0, %v1208
    %v1210 = vpop.f32.mrb[0].mxu0
    %v1211 = vpop.f32.mrb[0].mxu0
    %v1212 = vpop.f32.mrb[0].mxu0
    %1213 = vdwg.mxu0
    %1214 = vrot.lane.b32.xlu0 %v391, 104
    %v1215 = vpop.permute.xlu0 %1214
    %v1217 = vsel %vm392, %v1165, 0
    %v1220 = vsel %vm512, %v1215, 0
    %1222 = vmatprep.subr.bf16.mxu0 0
    %1223 = vmatpush1.bf16.msra.mxu0 %v1220
    %1224 = vmatprep.subr.bf16.mxu0 0
    %1225 = vmatpush1.bf16.msra.mxu0 0
    %1226 = vmatprep.subr.bf16.mxu0 0
    %1227 = vmatpush1.bf16.msra.mxu0 0
    %1228 = vmatprep.subr.bf16.mxu0 0
    %1229 = vmatpush1.bf16.msra.mxu0 0
    %1230 = vmatprep.subr.bf16.mxu0 0
    %1231 = vmatpush1.bf16.msra.mxu0 0
    %1232 = vmatprep.subr.bf16.mxu0 0
    %1233 = vmatpush1.bf16.msra.mxu0 0
    %1234 = vmatprep.subr.bf16.mxu0 0
    %1235 = vmatpush1.bf16.msra.mxu0 0
    %1236 = vmatprep.subr.bf16.mxu0 0
    %1237 = vmatpush1.bf16.msra.mxu0 0
    %1238 = vmatprep.subr.bf16.mxu0 0
    %1239 = vmatpush1.bf16.msra.mxu0 0
    %1240 = vmatprep.subr.bf16.mxu0 0
    %1241 = vmatpush1.bf16.msra.mxu0 0
    %1242 = vmatprep.subr.bf16.mxu0 0
    %1243 = vmatpush1.bf16.msra.mxu0 0
    %1244 = vmatprep.subr.bf16.mxu0 0
    %1245 = vmatpush1.bf16.msra.mxu0 0
    %1246 = vmatprep.subr.bf16.mxu0 0
    %1247 = vmatpush1.bf16.msra.mxu0 0
    %1248 = vmatprep.subr.bf16.mxu0 0
    %1249 = vmatpush1.bf16.msra.mxu0 0
    %1250 = vmatprep.subr.bf16.mxu0 0
    %1251 = vmatpush1.bf16.msra.mxu0 0
    %1252 = vmatprep.subr.bf16.mxu0 0
    %1253 = vmatpush1.bf16.msra.mxu0 0
    %1254 = vmatprep.mubr.bf16.mxu0 0
    %1255 = vmatmul.mubr.bf16.gmra.mrb[0].mxu0 %v1217
    %v1256 = vpop.f32.mrb[0].mxu0
    %v1257 = vadd.f32 0.0, %v1256
    %v1258 = vpop.f32.mrb[0].mxu0
    %v1259 = vpop.f32.mrb[0].mxu0
    %v1260 = vpop.f32.mrb[0].mxu0
    %1261 = vdwg.mxu0
    %1264 = vrot.lane.b32.xlu0 %v769, 8
    %v1265 = vpop.permute.xlu0 %1264
    %1266 = vrot.lane.b32.xlu0 %v817, 8
    %v1267 = vpop.permute.xlu0 %1266
    %1272 = vrot.lane.b32.xlu0 %v989, 16
    %v1273 = vpop.permute.xlu0 %1272
    %1274 = vrot.lane.b32.xlu0 %v1037, 16
    %v1275 = vpop.permute.xlu0 %1274
    %1280 = vrot.lane.b32.xlu0 %v1209, 24
    %v1281 = vpop.permute.xlu0 %1280
    %1282 = vrot.lane.b32.xlu0 %v1257, 24
    %v1283 = vpop.permute.xlu0 %1282
    %v1286 = vsel %vm392, %v551, %v1265
    %v1287 = vsel %vm392, %v597, %v1267
    %vm1288 = vcmask 130048
    %v1289 = vsel %vm1288, %v1286, %v1273
    %v1290 = vsel %vm1288, %v1287, %v1275
    %vm1291 = vcmask 195584
    %v1292 = vsel %vm1291, %v1289, %v1281
    %v1293 = vsel %vm1291, %v1290, %v1283
    %v1294 = vpack.c.bf16 %v1293, %v1292
    %v1295 = vld [vmem:[#allocation10] sm:$0xf]
    %v1296 = vld [vmem:[#allocation10 + $0x4] sm:$0xf]
    %v1297 = vld [vmem:[#allocation10 + $0x8] sm:$0xf]
    %v1298 = vld [vmem:[#allocation10 + $0xc] sm:$0xf]
    %v1299 = vld [vmem:[%s9] sm:$0x1]
    %v1301 = vlaneseq
    %v1302 = vshrl.u32 %v1301, 7
    %v1303 = vsub.s32 0, %v1302
    %v1304 = vrot.slane %v1299, %v1303
    %v1310 = vunpack.c.l.b16 %v1295
    %v1311 = vunpack.c.l.b16 %v1296
    %v1312 = vunpack.c.l.b16 %v1297
    %v1313 = vunpack.c.l.b16 %v1298
    %v1314 = vpack.c.b16 %v1311, %v1310
    %v1315 = vpack.c.b16 %v1313, %v1312
    %v1319 = vsel %vm115, %v1294, 0
    %1321 = vmatprep.subr.bf16.mxu0 0
    %1322 = vmatpush1.bf16.msra.mxu0 %v1314
    %1323 = vmatprep.subr.bf16.mxu0 0
    %1324 = vmatpush1.bf16.msra.mxu0 %v1315
    %1325 = vmatprep.subr.bf16.mxu0 0
    %1326 = vmatpush1.bf16.msra.mxu0 0
    %1327 = vmatprep.subr.bf16.mxu0 0
    %1328 = vmatpush1.bf16.msra.mxu0 0
    %1329 = vmatprep.subr.bf16.mxu0 0
    %1330 = vmatpush1.bf16.msra.mxu0 0
    %1331 = vmatprep.subr.bf16.mxu0 0
    %1332 = vmatpush1.bf16.msra.mxu0 0
    %1333 = vmatprep.subr.bf16.mxu0 0
    %1334 = vmatpush1.bf16.msra.mxu0 0
    %1335 = vmatprep.subr.bf16.mxu0 0
    %1336 = vmatpush1.bf16.msra.mxu0 0
    %1337 = vmatprep.subr.bf16.mxu0 0
    %1338 = vmatpush1.bf16.msra.mxu0 0
    %1339 = vmatprep.subr.bf16.mxu0 0
    %1340 = vmatpush1.bf16.msra.mxu0 0
    %1341 = vmatprep.subr.bf16.mxu0 0
    %1342 = vmatpush1.bf16.msra.mxu0 0
    %1343 = vmatprep.subr.bf16.mxu0 0
    %1344 = vmatpush1.bf16.msra.mxu0 0
    %1345 = vmatprep.subr.bf16.mxu0 0
    %1346 = vmatpush1.bf16.msra.mxu0 0
    %1347 = vmatprep.subr.bf16.mxu0 0
    %1348 = vmatpush1.bf16.msra.mxu0 0
    %1349 = vmatprep.subr.bf16.mxu0 0
    %1350 = vmatpush1.bf16.msra.mxu0 0
    %1351 = vmatprep.subr.bf16.mxu0 0
    %1352 = vmatpush1.bf16.msra.mxu0 0
    %1353 = vmatprep.mubr.bf16.mxu0 0
    %1354 = vmatmul.mubr.bf16.gmra.mrb[0].mxu0 %v1319
    %v1355 = vpop.f32.mrb[0].mxu0
    %v1356 = vadd.f32 %v1304, %v1355
    %v1357 = vpop.f32.mrb[0].mxu0
    %v1358 = vpop.f32.mrb[0].mxu0
    %v1359 = vadd.f32 %v1304, %v1358
    %v1360 = vpop.f32.mrb[0].mxu0
    %1361 = vdwg.mxu0
    %v1362 = vadd.f32 %v111, %v1356
    %v1363 = vadd.f32 %v112, %v1359
    %1364 = vst.msk [vmem:[#allocation11] sm:$0xff] %vm115, %v1362
    %1365 = vst.msk [vmem:[#allocation11 + $0x8] sm:$0xff] %vm115, %v1363
    // Predicated region
    $region70: #{tpu_custom_call.1} parent=1 // pred_check
      _
    $region71: #{tpu_custom_call.1} parent=1 // pred_check_branch
      %1367 = sbr.rel (0) target = $region73
    $region72: #{tpu_custom_call.1} parent=1 // pred_region
      %s1369 = ssub.s32 256, 256
      %1370 = vsyncadd [#allocation4], %s1369
      %s1371 = sshll.u32 [#allocation11], 4
      %s1372 = int_to_ptr.vmem [resolvable:$true] %s1371
      %1377 = dma.vmem_to_hbm [thread:$0]  %s1372, 256, %s12, [#allocation4], 128, 128, 8
    $region73: #{tpu_custom_call.1} parent=1 // pred_fallthru
      _
    // Predicated region
    $region74: #{tpu_custom_call.1} parent=1 // pred_check
      _
    $region75: #{tpu_custom_call.1} parent=1 // pred_check_branch
      %1379 = sbr.rel (0) target = $region77
    $region76: #{tpu_custom_call.1} parent=1 // pred_region
      %1380 = dma.done [#allocation4], 256
    $region77: #{tpu_custom_call.1} parent=1 // pred_fallthru
      _
    %1381 = vsyncpa [#allocation3], 1
    %1382 = vsyncpa [#allocation6], 1
    %1383 = vsyncpa [#allocation9], 1
    %1384 = vsyncpa [#allocation4], 1

</llo_original>
